<compile_context>
chip_gen: v7x
topology: tpu7x:2x2x1
jax: 0.10.0
libtpu: 0.0.40
codegen_flags: <defaults>
</compile_context>

<pallas_src>
import math

import jax
import jax.numpy as jnp
from jax.experimental import pallas as pl
from jax.experimental.pallas import tpu as pltpu


# 40 MiB: safe on v7x (64 MiB physical per TC, >=16 MiB headroom for Mosaic
# scratch); on v5e/v6e (128 MiB) this could be raised for bigger tiles.
VMEM_LIMIT = 40 * 1024 * 1024


def _spec(shape, index_map, pipeline_mode=None):
    """BlockSpec builder that only passes pipeline_mode when requested."""
    if pipeline_mode is None:
        return pl.BlockSpec(shape, index_map)
    return pl.BlockSpec(shape, index_map, pipeline_mode=pipeline_mode)


# ---------------------------------------------------------------------------
# Helpers traced inside kernels (all f32 math)
# ---------------------------------------------------------------------------
def _layernorm(x, g, b, eps=1e-5):
    mu = jnp.mean(x, axis=-1, keepdims=True)
    var = jnp.mean((x - mu) ** 2, axis=-1, keepdims=True)
    return (x - mu) * jax.lax.rsqrt(var + eps) * g + b


def _gelu(x):
    c = math.sqrt(2.0 / math.pi)
    return 0.5 * x * (1.0 + jnp.tanh(c * (x + 0.044715 * x * x * x)))


# ---------------------------------------------------------------------------
# Kernel 1a: K/V projection, once per token (grid = (B, S // TS))
# ---------------------------------------------------------------------------
def kv_proj_kernel(x_ref, wk_ref, bk_ref, wv_ref, bv_ref, k_ref, v_ref):
    x = x_ref[0].astype(jnp.bfloat16)                                 # (TS, D)
    k = jnp.dot(x, wk_ref[...], preferred_element_type=jnp.float32) + bk_ref[...]
    v = jnp.dot(x, wv_ref[...], preferred_element_type=jnp.float32) + bv_ref[...]
    k_ref[0] = k.astype(jnp.bfloat16)
    v_ref[0] = v.astype(jnp.bfloat16)


# ---------------------------------------------------------------------------
# Kernel 1b: single transformer encoder layer (BART backbone stand-in)
# grid = (B, S // TQ); each step handles one (TQ, D) query tile against the
# precomputed full-sequence K/V.
# ---------------------------------------------------------------------------
def encoder_layer_kernel(xq_ref, k_ref, v_ref, mb_ref,
                         wq_ref, bq_ref, wo_ref, bo_ref,
                         g1_ref, be1_ref, w1_ref, b1_ref, w2_ref, b2_ref,
                         g2_ref, be2_ref, o_ref):
    xq = xq_ref[0]                     # (TQ, D) f32 (residual / LN path)
    k = k_ref[0]                       # (S, D)  bf16, precomputed
    v = v_ref[0]                       # (S, D)  bf16, precomputed
    mbias = mb_ref[0]                  # (1, S)  f32 additive mask bias

    # wq/bq already carry the 1/sqrt(D) attention scale (folded at init).
    q = jnp.dot(xq.astype(jnp.bfloat16), wq_ref[...],
                preferred_element_type=jnp.float32) + bq_ref[...]

    # contract the D axes directly (no explicit transpose of K)
    scores = jax.lax.dot_general(
        q.astype(jnp.bfloat16), k, (((1,), (1,)), ((), ())),
        preferred_element_type=jnp.float32) + mbias                   # (TQ, S)

    # softmax over keys (f32), divide moved to the EUP
    scores = scores - jnp.max(scores, axis=-1, keepdims=True)
    p = jnp.exp(scores)
    p = p * pl.reciprocal(jnp.sum(p, axis=-1, keepdims=True), approx=True)

    attn = jnp.dot(p.astype(jnp.bfloat16), v, preferred_element_type=jnp.float32)
    attn = jnp.dot(attn.astype(jnp.bfloat16), wo_ref[...],
                   preferred_element_type=jnp.float32) + bo_ref[...]

    h = _layernorm(xq + attn, g1_ref[...], be1_ref[...])

    ff = _gelu(jnp.dot(h.astype(jnp.bfloat16), w1_ref[...],
                       preferred_element_type=jnp.float32) + b1_ref[...])
    ff = jnp.dot(ff.astype(jnp.bfloat16), w2_ref[...],
                 preferred_element_type=jnp.float32) + b2_ref[...]

    # hidden emitted in bf16 (consumers only need bf16 matmul inputs)
    o_ref[0] = _layernorm(h + ff, g2_ref[...], be2_ref[...]).astype(o_ref.dtype)


def encoder_forward(x, mask_bias, params, tq=None, ts=None, single_buffer=True):
    B, S, D = x.shape
    F = params["w1"].shape[1]
    buf1 = pl.Buffered(1) if single_buffer else None

    def inv(shape):   # grid-invariant weights: constant index_map, single-buffered
        return _spec(shape, lambda b, q, _n=len(shape): (0,) * _n, buf1)

    # -- K/V projection: once per token, not once per query tile -------------
    if ts is None:
        ts = min(S, 512)
    assert S % ts == 0 and (ts == S or ts % 8 == 0)
    k_full, v_full = pl.pallas_call(
        kv_proj_kernel,
        out_shape=(jax.ShapeDtypeStruct((B, S, D), jnp.bfloat16),
                   jax.ShapeDtypeStruct((B, S, D), jnp.bfloat16)),
        grid=(B, S // ts),
        in_specs=[pl.BlockSpec((1, ts, D), lambda b, t: (b, t, 0)),
                  inv((D, D)), inv((1, D)), inv((D, D)), inv((1, D))],
        out_specs=(pl.BlockSpec((1, ts, D), lambda b, t: (b, t, 0)),
                   pl.BlockSpec((1, ts, D), lambda b, t: (b, t, 0))),
        compiler_params=pltpu.CompilerParams(
            dimension_semantics=("parallel", "parallel"),
            vmem_limit_bytes=VMEM_LIMIT),
    )(x, params["wk"], params["bk"], params["wv"], params["bv"])

    # -- attention + FFN per query tile ---------------------------------------
    if tq is None:
        tq = min(S, 256)
    assert S % tq == 0 and (tq == S or tq % 8 == 0)
    nq = S // tq

    in_specs = [
        pl.BlockSpec((1, tq, D), lambda b, q: (b, q, 0)),   # x query tile (f32)
        pl.BlockSpec((1, S, D), lambda b, q: (b, 0, 0)),    # K full seq (bf16)
        pl.BlockSpec((1, S, D), lambda b, q: (b, 0, 0)),    # V full seq (bf16)
        pl.BlockSpec((1, 1, S), lambda b, q: (b, 0, 0)),    # additive mask bias
        inv((D, D)), inv((1, D)),                           # wq (scale folded), bq
        inv((D, D)), inv((1, D)),                           # wo, bo
        inv((1, D)), inv((1, D)),                           # ln1 gamma, beta
        inv((D, F)), inv((1, F)),                           # ffn w1, b1
        inv((F, D)), inv((1, D)),                           # ffn w2, b2
        inv((1, D)), inv((1, D)),                           # ln2 gamma, beta
    ]
    return pl.pallas_call(
        encoder_layer_kernel,
        out_shape=jax.ShapeDtypeStruct((B, S, D), jnp.bfloat16),
        grid=(B, nq),
        in_specs=in_specs,
        out_specs=pl.BlockSpec((1, tq, D), lambda b, q: (b, q, 0)),
        compiler_params=pltpu.CompilerParams(
            dimension_semantics=("parallel", "parallel"),
            vmem_limit_bytes=VMEM_LIMIT),
    )(x, k_full, v_full, mask_bias,
      params["wq"], params["bq"], params["wo"], params["bo"],
      params["ln1_g"], params["ln1_b"],
      params["w1"], params["b1"], params["w2"], params["b2"],
      params["ln2_g"], params["ln2_b"])


# ---------------------------------------------------------------------------
# Kernel 2: BartClassificationHead pooler: tanh(h @ W1 + b1) @ W2 + b2
# (dropout p=0.0 -> identity).  Output lane dim padded to 128 for dense vst;
# column 0 holds the real logit, caller slices it.
# ---------------------------------------------------------------------------
def pooler_kernel(h_ref, w1_ref, b1_ref, w2_ref, b2_ref, o_ref):
    h = h_ref[...].astype(jnp.bfloat16)                               # (B, D)
    t = jnp.tanh(jnp.dot(h, w1_ref[...], preferred_element_type=jnp.float32)
                 + b1_ref[...])
    o_ref[...] = (jnp.dot(t.astype(jnp.bfloat16), w2_ref[...],
                          preferred_element_type=jnp.float32) + b2_ref[...])


def pooler_forward(h, params):
    B, D = h.shape

    def full(shape):
        return pl.BlockSpec(shape, lambda i, _n=len(shape): (0,) * _n)

    out = pl.pallas_call(
        pooler_kernel,
        out_shape=jax.ShapeDtypeStruct((B, 128), jnp.float32),
        grid=(1,),
        in_specs=[full((B, D)), full((D, D)), full((1, D)),
                  full((D, 128)), full((1, 128))],
        out_specs=full((B, 128)),
        compiler_params=pltpu.CompilerParams(
            dimension_semantics=("arbitrary",)),
    )(h, params["pool_w1"], params["pool_b1"],
      params["pool_w2_pad"], params["pool_b2_pad"])
    return out[:, 0]                                                  # (B,)


# ---------------------------------------------------------------------------
# Kernel 3: LM cross-entropy (stand-in for bart_conditional(...).loss)
# grid = (B // TB, V // TV).  TB batch elements are flattened onto the lane
# axis (TB*S), so each step does a (TV, D) x (D, TB*S) MXU matmul and the tied
# embedding is streamed from HBM only once per TB examples.  Online
# max / logsumexp / picked-logit accumulators live in VMEM scratch; the kernel
# emits per-position NLL (lane-dense) and the per-example mean is done in XLA.
# ---------------------------------------------------------------------------
def gen_loss_kernel(h_ref, lab_ref, emb_ref, lmb_ref, o_ref,
                    m_sc, l_sc, pick_sc):
    vi = pl.program_id(1)
    nv = pl.num_programs(1)

    @pl.when(vi == 0)
    def _():
        m_sc[...] = jnp.full_like(m_sc, -jnp.inf)
        l_sc[...] = jnp.zeros_like(l_sc)
        pick_sc[...] = jnp.zeros_like(pick_sc)

    h = h_ref[0]                       # (TB*S, D)  bf16
    emb = emb_ref[...]                 # (TV, D)    bf16 (tied embedding tile)
    labels = lab_ref[0]                # (1, TB*S)  int32, lane-major

    # (TV, TB*S) logits: contract D directly (no transposed embedding copy)
    logits = jax.lax.dot_general(
        emb, h, (((1,), (1,)), ((), ())),
        preferred_element_type=jnp.float32) + lmb_ref[...]            # (TV, TB*S)

    tv = logits.shape[0]
    row = jax.lax.broadcasted_iota(jnp.int32, logits.shape, 0) + vi * tv
    # masked select of the label logit (exactly one hit across all vocab tiles)
    pick_sc[...] += jnp.sum(jnp.where(row == labels, logits, 0.0),
                            axis=0, keepdims=True)

    # online logsumexp over the vocab axis
    tile_max = jnp.max(logits, axis=0, keepdims=True)                 # (1, TB*S)
    m_new = jnp.maximum(m_sc[...], tile_max)
    l_sc[...] = (l_sc[...] * jnp.exp(m_sc[...] - m_new)
                 + jnp.sum(jnp.exp(logits - m_new), axis=0, keepdims=True))
    m_sc[...] = m_new

    @pl.when(vi == nv - 1)
    def _():
        # per-position negative log-likelihood, lane-dense
        o_ref[0] = m_sc[...] + jnp.log(l_sc[...]) - pick_sc[...]


def _pick_batch_tile(B, max_tb=8):
    # Largest tile <= max_tb dividing B while keeping >= 2 batch-groups so both
    # v7x TensorCores get grid work; fall back to 1.
    for tb in (max_tb, 4, 2):
        if tb <= B and B % tb == 0 and B // tb >= 2:
            return tb
    return 1


def gen_loss_forward(hidden_bf16, labels, params, tv=256, tb=None,
                     single_buffer=True):
    B, S, D = hidden_bf16.shape
    V = params["tok_emb"].shape[0]
    tv = min(tv, V)                 # 256 fills the 256-wide v6e/v7x MXU; still
    assert V % tv == 0 and tv % 8 == 0   # a multiple of v5e's 128-wide MXU
    nv = V // tv

    if tb is None:
        tb = _pick_batch_tile(B)
    assert B % tb == 0
    G = B // tb
    TBS = tb * S
    buf1 = pl.Buffered(1) if single_buffer else None

    h = hidden_bf16.reshape(G, TBS, D)               # flatten TB examples on lanes
    lab = labels.astype(jnp.int32).reshape(G, 1, TBS)

    nll = pl.pallas_call(
        gen_loss_kernel,
        out_shape=jax.ShapeDtypeStruct((G, 1, TBS), jnp.float32),
        grid=(G, nv),
        in_specs=[
            _spec((1, TBS, D), lambda g, v: (g, 0, 0), buf1),   # hidden (vocab-invariant)
            _spec((1, 1, TBS), lambda g, v: (g, 0, 0), buf1),   # labels (lane-major)
            pl.BlockSpec((tv, D), lambda g, v: (v, 0)),         # tied embedding tile
            pl.BlockSpec((tv, 1), lambda g, v: (v, 0)),         # lm bias tile
        ],
        out_specs=pl.BlockSpec((1, 1, TBS), lambda g, v: (g, 0, 0)),
        scratch_shapes=[pltpu.VMEM((1, TBS), jnp.float32),      # running max
                        pltpu.VMEM((1, TBS), jnp.float32),      # running denom
                        pltpu.VMEM((1, TBS), jnp.float32)],     # picked logit
        compiler_params=pltpu.CompilerParams(
            dimension_semantics=("parallel", "arbitrary"),
            vmem_limit_bytes=VMEM_LIMIT),
    )(h, lab, params["tok_emb"], params["lm_bias"])

    # per-example mean cross-entropy over positions (tiny XLA reduction)
    return nll.reshape(B, S).mean(axis=1)


# ---------------------------------------------------------------------------
# Parameter init (deterministic, synthetic).  Matmul weights stored bf16;
# biases / layernorm params / positional embedding stay f32.  The 1/sqrt(D)
# attention scale is folded into wq/bq.
# ---------------------------------------------------------------------------
def init_params(key, vocab, d_model, d_ff, max_pos):
    ks = jax.random.split(key, 10)
    std = 0.02
    scale = 1.0 / math.sqrt(d_model)
    nb = lambda k, shape, s=1.0: (s * std * jax.random.normal(k, shape)).astype(jnp.bfloat16)
    nf = lambda k, shape: (std * jax.random.normal(k, shape)).astype(jnp.float32)
    zf = lambda shape: jnp.zeros(shape, jnp.float32)

    params = dict(
        tok_emb=nb(ks[0], (vocab, d_model)),           # (V, D) bf16, also tied LM head
        pos_emb=nf(ks[1], (max_pos, d_model)),
        wq=nb(ks[2], (d_model, d_model), scale), bq=zf((1, d_model)),  # scale folded
        wk=nb(ks[3], (d_model, d_model)), bk=zf((1, d_model)),
        wv=nb(ks[4], (d_model, d_model)), bv=zf((1, d_model)),
        wo=nb(ks[5], (d_model, d_model)), bo=zf((1, d_model)),
        ln1_g=jnp.ones((1, d_model), jnp.float32), ln1_b=zf((1, d_model)),
        w1=nb(ks[6], (d_model, d_ff)), b1=zf((1, d_ff)),
        w2=nb(ks[7], (d_ff, d_model)), b2=zf((1, d_model)),
        ln2_g=jnp.ones((1, d_model), jnp.float32), ln2_b=zf((1, d_model)),
        # pooler (BartClassificationHead: d_model -> d_model -> 1)
        pool_w1=nb(ks[8], (d_model, d_model)), pool_b1=zf((1, d_model)),
        # LM final-logits bias, kept (V, 1) so vocab tiles broadcast over lanes
        lm_bias=zf((vocab, 1)),
    )
    # out_proj (d_model -> 1) lane-padded to 128 for a dense output store
    w2 = (std * jax.random.normal(ks[9], (d_model, 1))).astype(jnp.bfloat16)
    params["pool_w2_pad"] = jnp.pad(w2, ((0, 0), (0, 127)))
    params["pool_b2_pad"] = zf((1, 128))
    return params


# ---------------------------------------------------------------------------
# BartGAR.forward equivalent
# ---------------------------------------------------------------------------
def _bart_gar_forward(params, batch_data, is_test, single_buffer):
    ids = batch_data["sequence_input_ids"]              # (B, S) int32
    attn_mask = batch_data["sequence_attention_mask"]   # (B, S)
    eos_position = batch_data["eos_position"]           # (B, S), one 1 per row
    B, S = ids.shape

    # glue: embedding lookup + positions (f32)
    x = params["tok_emb"][ids].astype(jnp.float32) + params["pos_emb"][:S][None, :, :]

    # additive mask bias: 0 where keep, -1e9 where masked
    mask_bias = (attn_mask.astype(jnp.float32) - 1.0).reshape(B, 1, S) * 1e9

    # backbone (Pallas kernels 1a/1b); hidden emitted directly in bf16
    hidden = encoder_forward(x, mask_bias, params,
                             single_buffer=single_buffer)   # (B, S, D) bf16

    # sequence_hidden[classification_head_token == 1, :]  (one EOS per row)
    eos_idx = jnp.argmax(eos_position == 1, axis=1)
    pooled_in = hidden[jnp.arange(B), eos_idx]           # (B, D) bf16

    # pooler (Pallas kernel 2) + squeeze(1)
    sequence_score = pooler_forward(pooled_in, params)   # (B,)

    if is_test:
        return sequence_score

    next_ids = batch_data["next_utterance_ids"]          # (B, S)
    has_next = batch_data["has_next_label"]              # (B,)

    per_example_loss = gen_loss_forward(hidden, next_ids, params,
                                        single_buffer=single_buffer)   # (B,)

    keep = (has_next == 1).astype(jnp.float32)
    total = jnp.sum(per_example_loss * keep)
    cnt = jnp.sum(has_next.astype(jnp.float32))
    gen_loss = jnp.where(cnt > 0, total / jnp.maximum(cnt, 1.0), 0.0)
    return sequence_score, gen_loss


def bart_gar_forward(params, batch_data, is_test=False):
    try:
        out = _bart_gar_forward(params, batch_data, is_test, single_buffer=True)
        return jax.block_until_ready(out)
    except Exception:
        # Fallback: this JAX build rejected pipeline_mode=pl.Buffered(1);
        # rerun with default double-buffering (identical results, more VMEM).
        return _bart_gar_forward(params, batch_data, is_test, single_buffer=False)


# ---------------------------------------------------------------------------
# Demo
# ---------------------------------------------------------------------------
if __name__ == "__main__":
    B, S, D, F, V = 2, 8, 32, 64, 256

    params = init_params(jax.random.PRNGKey(0), V, D, F, S)

    k1, k2 = jax.random.split(jax.random.PRNGKey(0))
    sequence_input_ids = jax.random.randint(k1, (B, S), 0, V, dtype=jnp.int32)
    sequence_attention_mask = jnp.ones((B, S), jnp.int32)
    eos_position = jnp.zeros((B, S), jnp.int32).at[:, S - 1].set(1)
    next_utterance_ids = jax.random.randint(k2, (B, S), 0, V, dtype=jnp.int32)
    has_next_label = jnp.array([1, 0], jnp.int32)

    batch_data = {
        "sequence_input_ids": sequence_input_ids,
        "sequence_attention_mask": sequence_attention_mask,
        "eos_position": eos_position,
        "next_utterance_ids": next_utterance_ids,
        "has_next_label": has_next_label,
    }

    score, gen_loss = bart_gar_forward(params, batch_data, is_test=False)
    jax.block_until_ready((score, gen_loss))
    assert score.shape == (B,) and gen_loss.shape == ()
    print("KERNEL_OK")
</pallas_src>

<mosaic_0001>
module attributes {stable_mosaic.version = 11 : i64} {
  func.func @kv_proj_kernel(%arg0: i32, %arg1: i32, %arg2: memref<1x8x32xf32, #tpu.memory_space<vmem>>, %arg3: memref<32x32xbf16, #tpu.memory_space<vmem>>, %arg4: memref<1x32xf32, #tpu.memory_space<vmem>>, %arg5: memref<32x32xbf16, #tpu.memory_space<vmem>>, %arg6: memref<1x32xf32, #tpu.memory_space<vmem>>, %arg7: memref<1x8x32xbf16, #tpu.memory_space<vmem>>, %arg8: memref<1x8x32xbf16, #tpu.memory_space<vmem>>) attributes {dimension_semantics = [#tpu.dimension_semantics<parallel>, #tpu.dimension_semantics<parallel>], iteration_bounds = array<i64: 2, 1>, scalar_prefetch = 0 : i64, scratch_operands = 0 : i64, tpu.core_type = #tpu.core_type<tc>, window_params = [{transform_indices = @transform_0, window_bounds = array<i64: 1, 8, 32>}, {pipeline_mode = #tpu.pipeline_mode<synchronous>, transform_indices = @transform_1, window_bounds = array<i64: 32, 32>}, {pipeline_mode = #tpu.pipeline_mode<synchronous>, transform_indices = @transform_2, window_bounds = array<i64: 1, 32>}, {pipeline_mode = #tpu.pipeline_mode<synchronous>, transform_indices = @transform_3, window_bounds = array<i64: 32, 32>}, {pipeline_mode = #tpu.pipeline_mode<synchronous>, transform_indices = @transform_4, window_bounds = array<i64: 1, 32>}, {transform_indices = @transform_5, window_bounds = array<i64: 1, 8, 32>}, {transform_indices = @transform_6, window_bounds = array<i64: 1, 8, 32>}]} {
    %c0 = arith.constant 0 : index
    %c0_0 = arith.constant 0 : index
    %c0_1 = arith.constant 0 : index
    %0 = vector.load %arg2[%c0, %c0_0, %c0_1] : memref<1x8x32xf32, #tpu.memory_space<vmem>>, vector<1x8x32xf32>
    %1 = vector.shape_cast %0 : vector<1x8x32xf32> to vector<8x32xf32>
    %2 = arith.truncf %1 : vector<8x32xf32> to vector<8x32xbf16>
    %c0_2 = arith.constant 0 : index
    %c0_3 = arith.constant 0 : index
    %3 = vector.load %arg3[%c0_2, %c0_3] : memref<32x32xbf16, #tpu.memory_space<vmem>>, vector<32x32xbf16>
    %cst = arith.constant dense<0.000000e+00> : vector<8x32xf32>
    %4 = tpu.matmul %2, %3, %cst {dimension_numbers = #tpu.dot_dimension_numbers<[1], [0], [0], [1], [0, 0, 1, 1], [], []>} : vector<8x32xbf16>, vector<32x32xbf16>, vector<8x32xf32> -> vector<8x32xf32>
    %c0_4 = arith.constant 0 : index
    %c0_5 = arith.constant 0 : index
    %5 = vector.load %arg4[%c0_4, %c0_5] : memref<1x32xf32, #tpu.memory_space<vmem>>, vector<1x32xf32>
    %6 = vector.broadcast %5 : vector<1x32xf32> to vector<8x32xf32>
    %7 = arith.addf %4, %6 : vector<8x32xf32>
    %c0_6 = arith.constant 0 : index
    %c0_7 = arith.constant 0 : index
    %8 = vector.load %arg5[%c0_6, %c0_7] : memref<32x32xbf16, #tpu.memory_space<vmem>>, vector<32x32xbf16>
    %cst_8 = arith.constant dense<0.000000e+00> : vector<8x32xf32>
    %9 = tpu.matmul %2, %8, %cst_8 {dimension_numbers = #tpu.dot_dimension_numbers<[1], [0], [0], [1], [0, 0, 1, 1], [], []>} : vector<8x32xbf16>, vector<32x32xbf16>, vector<8x32xf32> -> vector<8x32xf32>
    %c0_9 = arith.constant 0 : index
    %c0_10 = arith.constant 0 : index
    %10 = vector.load %arg6[%c0_9, %c0_10] : memref<1x32xf32, #tpu.memory_space<vmem>>, vector<1x32xf32>
    %11 = vector.broadcast %10 : vector<1x32xf32> to vector<8x32xf32>
    %12 = arith.addf %9, %11 : vector<8x32xf32>
    %13 = arith.truncf %7 : vector<8x32xf32> to vector<8x32xbf16>
    %c0_11 = arith.constant 0 : index
    %c0_12 = arith.constant 0 : index
    %c0_13 = arith.constant 0 : index
    %14 = vector.load %arg7[%c0_11, %c0_12, %c0_13] : memref<1x8x32xbf16, #tpu.memory_space<vmem>>, vector<1x8x32xbf16>
    %15 = vector.shape_cast %14 : vector<1x8x32xbf16> to vector<8x32xbf16>
    %16 = vector.shape_cast %13 : vector<8x32xbf16> to vector<1x8x32xbf16>
    tpu.vector_store %arg7[%c0_11, %c0_12, %c0_13], %16 {strides = array<i32>} : memref<1x8x32xbf16, #tpu.memory_space<vmem>>, vector<1x8x32xbf16>,
    %17 = arith.truncf %12 : vector<8x32xf32> to vector<8x32xbf16>
    %c0_14 = arith.constant 0 : index
    %c0_15 = arith.constant 0 : index
    %c0_16 = arith.constant 0 : index
    %18 = vector.load %arg8[%c0_14, %c0_15, %c0_16] : memref<1x8x32xbf16, #tpu.memory_space<vmem>>, vector<1x8x32xbf16>
    %19 = vector.shape_cast %18 : vector<1x8x32xbf16> to vector<8x32xbf16>
    %20 = vector.shape_cast %17 : vector<8x32xbf16> to vector<1x8x32xbf16>
    tpu.vector_store %arg8[%c0_14, %c0_15, %c0_16], %20 {strides = array<i32>} : memref<1x8x32xbf16, #tpu.memory_space<vmem>>, vector<1x8x32xbf16>,
    return
  }
  func.func @transform_0(%arg0: i32, %arg1: i32) -> (i32, i32, i32) {
    %c0_i32 = arith.constant 0 : i32
    %c0_i32_0 = arith.constant 0 : i32
    return %arg0, %arg1, %c0_i32 : i32, i32, i32
  }
  func.func @transform_1(%arg0: i32, %arg1: i32) -> (i32, i32) {
    %c0_i32 = arith.constant 0 : i32
    %c0_i32_0 = arith.constant 0 : i32
    %c0_i32_1 = arith.constant 0 : i32
    return %c0_i32, %c0_i32_0 : i32, i32
  }
  func.func @transform_2(%arg0: i32, %arg1: i32) -> (i32, i32) {
    %c0_i32 = arith.constant 0 : i32
    %c0_i32_0 = arith.constant 0 : i32
    %c0_i32_1 = arith.constant 0 : i32
    return %c0_i32, %c0_i32_0 : i32, i32
  }
  func.func @transform_3(%arg0: i32, %arg1: i32) -> (i32, i32) {
    %c0_i32 = arith.constant 0 : i32
    %c0_i32_0 = arith.constant 0 : i32
    %c0_i32_1 = arith.constant 0 : i32
    return %c0_i32, %c0_i32_0 : i32, i32
  }
  func.func @transform_4(%arg0: i32, %arg1: i32) -> (i32, i32) {
    %c0_i32 = arith.constant 0 : i32
    %c0_i32_0 = arith.constant 0 : i32
    %c0_i32_1 = arith.constant 0 : i32
    return %c0_i32, %c0_i32_0 : i32, i32
  }
  func.func @transform_5(%arg0: i32, %arg1: i32) -> (i32, i32, i32) {
    %c0_i32 = arith.constant 0 : i32
    %c0_i32_0 = arith.constant 0 : i32
    return %arg0, %arg1, %c0_i32 : i32, i32, i32
  }
  func.func @transform_6(%arg0: i32, %arg1: i32) -> (i32, i32, i32) {
    %c0_i32 = arith.constant 0 : i32
    %c0_i32_0 = arith.constant 0 : i32
    return %arg0, %arg1, %c0_i32 : i32, i32, i32
  }
}

module attributes {stable_mosaic.version = 11 : i64} {
  func.func @kv_proj_kernel(%arg0: i32, %arg1: i32, %arg2: memref<1x8x32xf32, #tpu.memory_space<vmem>>, %arg3: memref<32x32xbf16, #tpu.memory_space<vmem>>, %arg4: memref<1x32xf32, #tpu.memory_space<vmem>>, %arg5: memref<32x32xbf16, #tpu.memory_space<vmem>>, %arg6: memref<1x32xf32, #tpu.memory_space<vmem>>, %arg7: memref<1x8x32xbf16, #tpu.memory_space<vmem>>, %arg8: memref<1x8x32xbf16, #tpu.memory_space<vmem>>) attributes {dimension_semantics = [#tpu.dimension_semantics<parallel>, #tpu.dimension_semantics<parallel>], iteration_bounds = array<i64: 2, 1>, scalar_prefetch = 0 : i64, scratch_operands = 0 : i64, tpu.core_type = #tpu.core_type<tc>, window_params = [{transform_indices = @transform_0, window_bounds = array<i64: 1, 8, 32>}, {pipeline_mode = #tpu.pipeline_mode<synchronous>, transform_indices = @transform_1, window_bounds = array<i64: 32, 32>}, {pipeline_mode = #tpu.pipeline_mode<synchronous>, transform_indices = @transform_2, window_bounds = array<i64: 1, 32>}, {pipeline_mode = #tpu.pipeline_mode<synchronous>, transform_indices = @transform_3, window_bounds = array<i64: 32, 32>}, {pipeline_mode = #tpu.pipeline_mode<synchronous>, transform_indices = @transform_4, window_bounds = array<i64: 1, 32>}, {transform_indices = @transform_5, window_bounds = array<i64: 1, 8, 32>}, {transform_indices = @transform_6, window_bounds = array<i64: 1, 8, 32>}]} {
    %c0 = arith.constant 0 : index
    %c0_0 = arith.constant 0 : index
    %c0_1 = arith.constant 0 : index
    %0 = vector.load %arg2[%c0, %c0_0, %c0_1] : memref<1x8x32xf32, #tpu.memory_space<vmem>>, vector<1x8x32xf32>
    %1 = vector.shape_cast %0 : vector<1x8x32xf32> to vector<8x32xf32>
    %2 = arith.truncf %1 : vector<8x32xf32> to vector<8x32xbf16>
    %c0_2 = arith.constant 0 : index
    %c0_3 = arith.constant 0 : index
    %3 = vector.load %arg3[%c0_2, %c0_3] : memref<32x32xbf16, #tpu.memory_space<vmem>>, vector<32x32xbf16>
    %cst = arith.constant dense<0.000000e+00> : vector<8x32xf32>
    %4 = tpu.matmul %2, %3, %cst {dimension_numbers = #tpu.dot_dimension_numbers<[1], [0], [0], [1], [0, 0, 1, 1], [], []>} : vector<8x32xbf16>, vector<32x32xbf16>, vector<8x32xf32> -> vector<8x32xf32>
    %c0_4 = arith.constant 0 : index
    %c0_5 = arith.constant 0 : index
    %5 = vector.load %arg4[%c0_4, %c0_5] : memref<1x32xf32, #tpu.memory_space<vmem>>, vector<1x32xf32>
    %6 = vector.broadcast %5 : vector<1x32xf32> to vector<8x32xf32>
    %7 = arith.addf %4, %6 : vector<8x32xf32>
    %c0_6 = arith.constant 0 : index
    %c0_7 = arith.constant 0 : index
    %8 = vector.load %arg5[%c0_6, %c0_7] : memref<32x32xbf16, #tpu.memory_space<vmem>>, vector<32x32xbf16>
    %cst_8 = arith.constant dense<0.000000e+00> : vector<8x32xf32>
    %9 = tpu.matmul %2, %8, %cst_8 {dimension_numbers = #tpu.dot_dimension_numbers<[1], [0], [0], [1], [0, 0, 1, 1], [], []>} : vector<8x32xbf16>, vector<32x32xbf16>, vector<8x32xf32> -> vector<8x32xf32>
    %c0_9 = arith.constant 0 : index
    %c0_10 = arith.constant 0 : index
    %10 = vector.load %arg6[%c0_9, %c0_10] : memref<1x32xf32, #tpu.memory_space<vmem>>, vector<1x32xf32>
    %11 = vector.broadcast %10 : vector<1x32xf32> to vector<8x32xf32>
    %12 = arith.addf %9, %11 : vector<8x32xf32>
    %13 = arith.truncf %7 : vector<8x32xf32> to vector<8x32xbf16>
    %c0_11 = arith.constant 0 : index
    %c0_12 = arith.constant 0 : index
    %c0_13 = arith.constant 0 : index
    %14 = vector.load %arg7[%c0_11, %c0_12, %c0_13] : memref<1x8x32xbf16, #tpu.memory_space<vmem>>, vector<1x8x32xbf16>
    %15 = vector.shape_cast %14 : vector<1x8x32xbf16> to vector<8x32xbf16>
    %16 = vector.shape_cast %13 : vector<8x32xbf16> to vector<1x8x32xbf16>
    tpu.vector_store %arg7[%c0_11, %c0_12, %c0_13], %16 {strides = array<i32>} : memref<1x8x32xbf16, #tpu.memory_space<vmem>>, vector<1x8x32xbf16>,
    %17 = arith.truncf %12 : vector<8x32xf32> to vector<8x32xbf16>
    %c0_14 = arith.constant 0 : index
    %c0_15 = arith.constant 0 : index
    %c0_16 = arith.constant 0 : index
    %18 = vector.load %arg8[%c0_14, %c0_15, %c0_16] : memref<1x8x32xbf16, #tpu.memory_space<vmem>>, vector<1x8x32xbf16>
    %19 = vector.shape_cast %18 : vector<1x8x32xbf16> to vector<8x32xbf16>
    %20 = vector.shape_cast %17 : vector<8x32xbf16> to vector<1x8x32xbf16>
    tpu.vector_store %arg8[%c0_14, %c0_15, %c0_16], %20 {strides = array<i32>} : memref<1x8x32xbf16, #tpu.memory_space<vmem>>, vector<1x8x32xbf16>,
    return
  }
  func.func @transform_0(%arg0: i32, %arg1: i32) -> (i32, i32, i32) {
    %c0_i32 = arith.constant 0 : i32
    %c0_i32_0 = arith.constant 0 : i32
    return %arg0, %arg1, %c0_i32 : i32, i32, i32
  }
  func.func @transform_1(%arg0: i32, %arg1: i32) -> (i32, i32) {
    %c0_i32 = arith.constant 0 : i32
    %c0_i32_0 = arith.constant 0 : i32
    %c0_i32_1 = arith.constant 0 : i32
    return %c0_i32, %c0_i32_0 : i32, i32
  }
  func.func @transform_2(%arg0: i32, %arg1: i32) -> (i32, i32) {
    %c0_i32 = arith.constant 0 : i32
    %c0_i32_0 = arith.constant 0 : i32
    %c0_i32_1 = arith.constant 0 : i32
    return %c0_i32, %c0_i32_0 : i32, i32
  }
  func.func @transform_3(%arg0: i32, %arg1: i32) -> (i32, i32) {
    %c0_i32 = arith.constant 0 : i32
    %c0_i32_0 = arith.constant 0 : i32
    %c0_i32_1 = arith.constant 0 : i32
    return %c0_i32, %c0_i32_0 : i32, i32
  }
  func.func @transform_4(%arg0: i32, %arg1: i32) -> (i32, i32) {
    %c0_i32 = arith.constant 0 : i32
    %c0_i32_0 = arith.constant 0 : i32
    %c0_i32_1 = arith.constant 0 : i32
    return %c0_i32, %c0_i32_0 : i32, i32
  }
  func.func @transform_5(%arg0: i32, %arg1: i32) -> (i32, i32, i32) {
    %c0_i32 = arith.constant 0 : i32
    %c0_i32_0 = arith.constant 0 : i32
    return %arg0, %arg1, %c0_i32 : i32, i32, i32
  }
  func.func @transform_6(%arg0: i32, %arg1: i32) -> (i32, i32, i32) {
    %c0_i32 = arith.constant 0 : i32
    %c0_i32_0 = arith.constant 0 : i32
    return %arg0, %arg1, %c0_i32 : i32, i32, i32
  }
}

</mosaic_0001>

<llo_original>
// kernel: tpu_custom_call.1
$region0: #{tpu_custom_call.1}
  #allocation0 [shape = 'u32[]', space=smem, size = 0x4, offset = 0x4, fixed_abs, tag = 'smem constant byte address 0x4 - core index']
  #allocation1 [shape = 'u32[144,128]{1,0:T(1,128)}', space=vmem, size = 0x12000, scoped, tag = 'internal scratch']
  %s0 = inlined_call_operand.hbm [shape: f32[2,8,32], index: 0, kind: input, shape index: {}]
  %s1 = inlined_call_operand.hbm [shape: bf16[32,32], index: 1, kind: input, shape index: {}]
  %s2 = inlined_call_operand.vmem [shape: f32[1,32], index: 2, kind: input, shape index: {}]
  %s3 = inlined_call_operand.hbm [shape: bf16[32,32], index: 3, kind: input, shape index: {}]
  %s4 = inlined_call_operand.vmem [shape: f32[1,32], index: 4, kind: input, shape index: {}]
  %s5 = inlined_call_operand.hbm [shape: bf16[2,8,32], index: 5, kind: output, shape index: {0}]
  %s6 = inlined_call_operand.hbm [shape: bf16[2,8,32], index: 6, kind: output, shape index: {1}]
  %7 = xla_tuple %s5, %s6
  %s8 = sld [smem:[#allocation0]]
  $region73: #{tpu_custom_call.1} parent=0
    _
  %s10 = ssub.s32 1, %s8
  %s11 = scalar_select 0, %s10, %s8
  $region1: #{tpu_custom_call.1} parent=0
    #allocation2 [shape = 'u8[8192]{0}', space=vmem, size = 0x2000, scoped, tag = 'input window, operand 0']
    #allocation3 [shape = 's32[2]{0}', space=sflag, size = 0x8, scoped, tag = 'scoped memory for tpu_custom_call.1']
    #allocation4 [shape = 's32[2]{0}', space=sflag, size = 0x8, scoped, tag = 'scoped memory for tpu_custom_call.1']
    #allocation5 [shape = 'u8[8192]{0}', space=vmem, size = 0x2000, scoped, tag = 'input window, operand 1, single buffered']
    #allocation6 [shape = 's32[1]{0}', space=sflag, size = 0x4, scoped, tag = 'scoped memory for tpu_custom_call.1']
    #allocation7 [shape = 'u8[8192]{0}', space=vmem, size = 0x2000, scoped, tag = 'input window, operand 3, single buffered']
    #allocation8 [shape = 'u8[4096]{0}', space=vmem, size = 0x1000, scoped, tag = 'output window, operand 0']
    #allocation9 [shape = 'u8[4096]{0}', space=vmem, size = 0x1000, scoped, tag = 'output window, operand 1']
    #allocation10 [shape = 's32[2]{0}', space=sflag, size = 0x8, scoped, tag = 'scoped memory for tpu_custom_call.1']
    %12 = vsyncpa [#allocation3], 0
    %s13 = scalar_lea.sflag [#allocation3], 1
    %14 = vsyncpa %s13, 0
    %15 = vsyncpa [#allocation6], 0
    %16 = vsyncpa [#allocation4], 0
    %s17 = scalar_lea.sflag [#allocation4], 1
    %18 = vsyncpa %s17, 0
    %19 = vsyncpa [#allocation10], 0
    %s20 = scalar_lea.sflag [#allocation10], 1
    %21 = vsyncpa %s20, 0
    loop: start=0, step=1, limit=4
    $region2: #{tpu_custom_call.1} parent=1 // loop_pre_header
      _
    $region3: #{tpu_custom_call.1} parent=1 // loop_header
      %s23 = sphi 0, %s27
      %p24 = scmp.ge.s32.totalorder %s23, 4
      %s30 = sphi 0, %s42
      %s31 = sphi 0, %s38
      %s32 = sphi 0, %s30
      %s33 = sphi 0, %s31
      %s34 = sphi 0, %s32
      %s35 = sphi 0, %s33
      %s47 = sphi 0, %s49
      %s50 = sphi 0, %s47
      %s51 = sphi 0, %s50
      %s67 = sphi 0, %s51
      %s71 = sphi 0, %s71
      %s73 = sphi 0, %s71
      %s74 = sphi 0, %s73
      %s88 = sphi 0, %s74
      %s92 = sphi 0, %s92
      %s94 = sphi 0, %s92
      %s95 = sphi 0, %s94
      %s109 = sphi 0, %s95
      %s113 = sphi 0, %s113
      %s115 = sphi 0, %s113
      %s116 = sphi 0, %s115
      %s130 = sphi 0, %s116
      %s134 = sphi 0, %s134
      %s136 = sphi 0, %s134
      %s137 = sphi 0, %s136
      %s151 = sphi 0, %s137
      %s159 = sphi 0, %s161
      %s162 = sphi 0, %s159
      %s163 = sphi 0, %s162
      %s179 = sphi 0, %s163
      %s187 = sphi 0, %s189
      %s190 = sphi 0, %s187
      %s191 = sphi 0, %s190
      %s207 = sphi 0, %s191
    $region4: #{tpu_custom_call.1} parent=1 // loop_header_branch
      %26 = sbr.rel (%p24) target = $region8
    $region5: #{tpu_custom_call.1} parent=1 // loop_body
      %s28 = ssub.s32 %s23, 1
      %s29 = ssub.s32 %s23, 2
      %s36 = sadd.s32 1, %s31
      %p37 = scmp.ge.s32.totalorder %s36, 1
      %s38 = scalar_select %p37, 0, %s36
      %s39 = sadd.s32 1, %s30
      %s40 = scalar_select %p37, %s39, %s30
      %p41 = scmp.ge.s32.totalorder %s40, 2
      %s42 = scalar_select %p41, 0, %s40
      %s43 = ssub.s32 %s30, %s42
      %s44 = ssub.s32 %s31, %s38
      %s45 = sor.u32 %s43, %s44
      %p46 = scmp.eq.s32.totalorder %s45, 0
      %s48 = sadd.s32 %s47, 1
      %s49 = scalar_select %p46, %s47, %s48
      %p52 = pneg %p46
      %p53 = scmp.eq.s32.totalorder %s23, 1
      %p54 = por %p52, %p53
      %p55 = scmp.ne.s32.totalorder %s47, %s50
      %p56 = scmp.eq.s32.totalorder %s23, 0
      %p57 = por %p55, %p56
      %p58 = scmp.ne.s32.totalorder %s47, %s50
      %p59 = scmp.eq.s32.totalorder %s28, 1
      %p60 = por %p58, %p59
      %p61 = scmp.ne.s32.totalorder %s50, %s51
      %p62 = scmp.eq.s32.totalorder %s28, 0
      %p63 = por %p61, %p62
      %p64 = scmp.ne.s32.totalorder %s50, %s51
      %p65 = scmp.eq.s32.totalorder %s29, 1
      %p66 = por %p64, %p65
      %p68 = scmp.ne.s32.totalorder %s51, %s67
      %p69 = scmp.eq.s32.totalorder %s29, 0
      %p70 = por %p68, %p69
      %s72 = sadd.s32 %s71, 1
      %p75 = scmp.eq.s32.totalorder %s23, 1
      %p76 = scmp.ne.s32.totalorder %s71, %s73
      %p77 = scmp.eq.s32.totalorder %s23, 0
      %p78 = por %p76, %p77
      %p79 = scmp.ne.s32.totalorder %s71, %s73
      %p80 = scmp.eq.s32.totalorder %s28, 1
      %p81 = por %p79, %p80
      %p82 = scmp.ne.s32.totalorder %s73, %s74
      %p83 = scmp.eq.s32.totalorder %s28, 0
      %p84 = por %p82, %p83
      %p85 = scmp.ne.s32.totalorder %s73, %s74
      %p86 = scmp.eq.s32.totalorder %s29, 1
      %p87 = por %p85, %p86
      %p89 = scmp.ne.s32.totalorder %s74, %s88
      %p90 = scmp.eq.s32.totalorder %s29, 0
      %p91 = por %p89, %p90
      %s93 = sadd.s32 %s92, 1
      %p96 = scmp.eq.s32.totalorder %s23, 1
      %p97 = scmp.ne.s32.totalorder %s92, %s94
      %p98 = scmp.eq.s32.totalorder %s23, 0
      %p99 = por %p97, %p98
      %p100 = scmp.ne.s32.totalorder %s92, %s94
      %p101 = scmp.eq.s32.totalorder %s28, 1
      %p102 = por %p100, %p101
      %p103 = scmp.ne.s32.totalorder %s94, %s95
      %p104 = scmp.eq.s32.totalorder %s28, 0
      %p105 = por %p103, %p104
      %p106 = scmp.ne.s32.totalorder %s94, %s95
      %p107 = scmp.eq.s32.totalorder %s29, 1
      %p108 = por %p106, %p107
      %p110 = scmp.ne.s32.totalorder %s95, %s109
      %p111 = scmp.eq.s32.totalorder %s29, 0
      %p112 = por %p110, %p111
      %s114 = sadd.s32 %s113, 1
      %p117 = scmp.eq.s32.totalorder %s23, 1
      %p118 = scmp.ne.s32.totalorder %s113, %s115
      %p119 = scmp.eq.s32.totalorder %s23, 0
      %p120 = por %p118, %p119
      %p121 = scmp.ne.s32.totalorder %s113, %s115
      %p122 = scmp.eq.s32.totalorder %s28, 1
      %p123 = por %p121, %p122
      %p124 = scmp.ne.s32.totalorder %s115, %s116
      %p125 = scmp.eq.s32.totalorder %s28, 0
      %p126 = por %p124, %p125
      %p127 = scmp.ne.s32.totalorder %s115, %s116
      %p128 = scmp.eq.s32.totalorder %s29, 1
      %p129 = por %p127, %p128
      %p131 = scmp.ne.s32.totalorder %s116, %s130
      %p132 = scmp.eq.s32.totalorder %s29, 0
      %p133 = por %p131, %p132
      %s135 = sadd.s32 %s134, 1
      %p138 = scmp.eq.s32.totalorder %s23, 1
      %p139 = scmp.ne.s32.totalorder %s134, %s136
      %p140 = scmp.eq.s32.totalorder %s23, 0
      %p141 = por %p139, %p140
      %p142 = scmp.ne.s32.totalorder %s134, %s136
      %p143 = scmp.eq.s32.totalorder %s28, 1
      %p144 = por %p142, %p143
      %p145 = scmp.ne.s32.totalorder %s136, %s137
      %p146 = scmp.eq.s32.totalorder %s28, 0
      %p147 = por %p145, %p146
      %p148 = scmp.ne.s32.totalorder %s136, %s137
      %p149 = scmp.eq.s32.totalorder %s29, 1
      %p150 = por %p148, %p149
      %p152 = scmp.ne.s32.totalorder %s137, %s151
      %p153 = scmp.eq.s32.totalorder %s29, 0
      %p154 = por %p152, %p153
      %s155 = ssub.s32 %s30, %s42
      %s156 = ssub.s32 %s31, %s38
      %s157 = sor.u32 %s155, %s156
      %p158 = scmp.eq.s32.totalorder %s157, 0
      %s160 = sadd.s32 %s159, 1
      %s161 = scalar_select %p158, %s159, %s160
      %p164 = pneg %p158
      %p165 = scmp.eq.s32.totalorder %s23, 1
      %p166 = por %p164, %p165
      %p167 = scmp.ne.s32.totalorder %s159, %s162
      %p168 = scmp.eq.s32.totalorder %s23, 0
      %p169 = por %p167, %p168
      %p170 = scmp.ne.s32.totalorder %s159, %s162
      %p171 = scmp.eq.s32.totalorder %s28, 1
      %p172 = por %p170, %p171
      %p173 = scmp.ne.s32.totalorder %s162, %s163
      %p174 = scmp.eq.s32.totalorder %s28, 0
      %p175 = por %p173, %p174
      %p176 = scmp.ne.s32.totalorder %s162, %s163
      %p177 = scmp.eq.s32.totalorder %s29, 1
      %p178 = por %p176, %p177
      %p180 = scmp.ne.s32.totalorder %s163, %s179
      %p181 = scmp.eq.s32.totalorder %s29, 0
      %p182 = por %p180, %p181
      %s183 = ssub.s32 %s30, %s42
      %s184 = ssub.s32 %s31, %s38
      %s185 = sor.u32 %s183, %s184
      %p186 = scmp.eq.s32.totalorder %s185, 0
      %s188 = sadd.s32 %s187, 1
      %s189 = scalar_select %p186, %s187, %s188
      %p192 = pneg %p186
      %p193 = scmp.eq.s32.totalorder %s23, 1
      %p194 = por %p192, %p193
      %p195 = scmp.ne.s32.totalorder %s187, %s190
      %p196 = scmp.eq.s32.totalorder %s23, 0
      %p197 = por %p195, %p196
      %p198 = scmp.ne.s32.totalorder %s187, %s190
      %p199 = scmp.eq.s32.totalorder %s28, 1
      %p200 = por %p198, %p199
      %p201 = scmp.ne.s32.totalorder %s190, %s191
      %p202 = scmp.eq.s32.totalorder %s28, 0
      %p203 = por %p201, %p202
      %p204 = scmp.ne.s32.totalorder %s190, %s191
      %p205 = scmp.eq.s32.totalorder %s29, 1
      %p206 = por %p204, %p205
      %p208 = scmp.ne.s32.totalorder %s191, %s207
      %p209 = scmp.eq.s32.totalorder %s29, 0
      %p210 = por %p208, %p209
      %p211 = scmp.le.s32.totalorder 1, %s23
      %p212 = scmp.lt.s32.totalorder %s23, 3
      %p213 = pnand %p211, %p212
      %p214 = pneg %p213
      // Predicated region
      $region9: #{tpu_custom_call.1} parent=5 // pred_check
        _
      $region10: #{tpu_custom_call.1} parent=5 // pred_check_branch
        %216 = sbr.rel (%p213) target = $region12
      $region11: #{tpu_custom_call.1} parent=5 // pred_region
        %s217 = ssub.s32 %s23, 1
        // Predicated region
        $region13: #{tpu_custom_call.1} parent=11 // pred_check
          %p218 = pneg %p84
        $region14: #{tpu_custom_call.1} parent=11 // pred_check_branch
          %220 = sbr.rel (%p218) target = $region16
        $region15: #{tpu_custom_call.1} parent=11 // pred_region
          %s222 = ssub.s32 256, 256
          %223 = vsyncadd [#allocation6], %s222
          %s224 = sshll.u32 [#allocation5], 4
          %s225 = int_to_ptr.vmem [resolvable:$true] %s224
          %230 = dma.hbm_to_vmem [thread:$0]  %s1, 256, %s225, [#allocation6], 64, 64, 4
        $region16: #{tpu_custom_call.1} parent=11 // pred_fallthru
          _
        // Predicated region
        $region17: #{tpu_custom_call.1} parent=11 // pred_check
          %p231 = pneg %p105
        $region18: #{tpu_custom_call.1} parent=11 // pred_check_branch
          %233 = sbr.rel (%p231) target = $region20
        $region19: #{tpu_custom_call.1} parent=11 // pred_region
          _
        $region20: #{tpu_custom_call.1} parent=11 // pred_fallthru
          _
        // Predicated region
        $region21: #{tpu_custom_call.1} parent=11 // pred_check
          %p234 = pneg %p126
        $region22: #{tpu_custom_call.1} parent=11 // pred_check_branch
          %236 = sbr.rel (%p234) target = $region24
        $region23: #{tpu_custom_call.1} parent=11 // pred_region
          %s238 = ssub.s32 256, 256
          %239 = vsyncadd [#allocation6], %s238
          %s240 = sshll.u32 [#allocation7], 4
          %s241 = int_to_ptr.vmem [resolvable:$true] %s240
          %246 = dma.hbm_to_vmem [thread:$0]  %s3, 256, %s241, [#allocation6], 64, 64, 4
        $region24: #{tpu_custom_call.1} parent=11 // pred_fallthru
          _
        // Predicated region
        $region25: #{tpu_custom_call.1} parent=11 // pred_check
          %p247 = pneg %p147
        $region26: #{tpu_custom_call.1} parent=11 // pred_check_branch
          %249 = sbr.rel (%p247) target = $region28
        $region27: #{tpu_custom_call.1} parent=11 // pred_region
          _
        $region28: #{tpu_custom_call.1} parent=11 // pred_fallthru
          _
      $region12: #{tpu_custom_call.1} parent=5 // pred_fallthru
        _
      %p250 = scmp.lt.s32.totalorder %s23, 2
      // Predicated region
      $region29: #{tpu_custom_call.1} parent=5 // pred_check
        %p251 = pneg %p250
      $region30: #{tpu_custom_call.1} parent=5 // pred_check_branch
        %253 = sbr.rel (%p251) target = $region32
      $region31: #{tpu_custom_call.1} parent=5 // pred_region
        // Predicated region
        $region33: #{tpu_custom_call.1} parent=31 // pred_check
          %p254 = pneg %p57
        $region34: #{tpu_custom_call.1} parent=31 // pred_check_branch
          %256 = sbr.rel (%p254) target = $region36
        $region35: #{tpu_custom_call.1} parent=31 // pred_region
          %s257 = sand.u32 %s47, 1
          %s258 = scalar_lea.sflag [#allocation3], %s257
          %s259 = sand.u32 %s47, 1
          %s260 = smul.addr %s259, 8
          %s261 = scalar_lea.vmem [#allocation2], %s260
          %s263 = ssub.s32 128, 128
          %264 = vsyncadd %s258, %s263
          %s265 = sadd.s32 %s31, %s30
          %s266 = smul.addr %s265, 128
          %s267 = scalar_lea.hbm %s0, %s266
          %s269 = sshll.u32 %s261, 4
          %s270 = int_to_ptr.vmem [resolvable:$true] %s269
          %272 = dma.hbm_to_vmem [thread:$0]  %s267, 128, %s270, %s258
        $region36: #{tpu_custom_call.1} parent=31 // pred_fallthru
          _
      $region32: #{tpu_custom_call.1} parent=5 // pred_fallthru
        _
      %p273 = scmp.le.s32.totalorder 1, %s23
      %p274 = scmp.lt.s32.totalorder %s23, 3
      %p275 = pnand %p273, %p274
      %p276 = pneg %p275
      // Predicated region
      $region37: #{tpu_custom_call.1} parent=5 // pred_check
        _
      $region38: #{tpu_custom_call.1} parent=5 // pred_check_branch
        %278 = sbr.rel (%p275) target = $region40
      $region39: #{tpu_custom_call.1} parent=5 // pred_region
        %s279 = ssub.s32 %s23, 1
        %s280 = sand.u32 %s50, 1
        %s281 = scalar_lea.sflag [#allocation3], %s280
        %s282 = sand.u32 %s50, 1
        %s283 = smul.addr %s282, 8
        %s284 = scalar_lea.vmem [#allocation2], %s283
        // Predicated region
        $region41: #{tpu_custom_call.1} parent=39 // pred_check
          %p285 = pneg %p63
        $region42: #{tpu_custom_call.1} parent=39 // pred_check_branch
          %287 = sbr.rel (%p285) target = $region44
        $region43: #{tpu_custom_call.1} parent=39 // pred_region
          %288 = dma.done %s281, 128
        $region44: #{tpu_custom_call.1} parent=39 // pred_fallthru
          _
        // Predicated region
        $region45: #{tpu_custom_call.1} parent=39 // pred_check
          %p289 = pneg %p84
        $region46: #{tpu_custom_call.1} parent=39 // pred_check_branch
          %291 = sbr.rel (%p289) target = $region48
        $region47: #{tpu_custom_call.1} parent=39 // pred_region
          %292 = dma.done [#allocation6], 256
        $region48: #{tpu_custom_call.1} parent=39 // pred_fallthru
          _
        // Predicated region
        $region49: #{tpu_custom_call.1} parent=39 // pred_check
          %p293 = pneg %p126
        $region50: #{tpu_custom_call.1} parent=39 // pred_check_branch
          %295 = sbr.rel (%p293) target = $region52
        $region51: #{tpu_custom_call.1} parent=39 // pred_region
          %296 = dma.done [#allocation6], 256
        $region52: #{tpu_custom_call.1} parent=39 // pred_fallthru
          _
        %s297 = sand.u32 %s50, 1
        %s298 = scalar_lea.sflag [#allocation3], %s297
        %s299 = sand.u32 %s50, 1
        %s300 = smul.addr %s299, 8
        %s301 = scalar_lea.vmem [#allocation2], %s300
        %p302 = pneg %p63
        %p303 = pneg %p60
        %p304 = pneg %p84
        %p305 = pneg %p81
        %p306 = pneg %p105
        %p307 = pneg %p102
        %p308 = pneg %p126
        %p309 = pneg %p123
        %p310 = pneg %p147
        %p311 = pneg %p144
        %p312 = pneg %p175
        %p313 = pneg %p172
        %s314 = sand.u32 %s162, 1
        %s315 = scalar_lea.sflag [#allocation4], %s314
        %s316 = sand.u32 %s162, 1
        %s317 = smul.addr %s316, 4
        %s318 = scalar_lea.vmem [#allocation8], %s317
        %p319 = pneg %p203
        %p320 = pneg %p200
        %s321 = sand.u32 %s190, 1
        %s322 = scalar_lea.sflag [#allocation10], %s321
        %s323 = sand.u32 %s190, 1
        %s324 = smul.addr %s323, 4
        %s325 = scalar_lea.vmem [#allocation9], %s324
        %v327 = vld [vmem:[%s284] sm:$0xff]
        %v328 = vpack.c.bf16 %v327, %v327
        %v329 = vld [vmem:[#allocation5] sm:$0xf]
        %v330 = vld [vmem:[#allocation5 + $0x4] sm:$0xf]
        %v331 = vld [vmem:[#allocation5 + $0x8] sm:$0xf]
        %v332 = vld [vmem:[#allocation5 + $0xc] sm:$0xf]
        %v333 = vld [vmem:[%s2] sm:$0x1]
        %v335 = vlaneseq
        %v336 = vshrl.u32 %v335, 7
        %v337 = vsub.s32 0, %v336
        %v338 = vrot.slane %v333, %v337
        %v344 = vunpack.c.l.b16 %v329
        %v345 = vunpack.c.l.b16 %v330
        %v346 = vunpack.c.l.b16 %v331
        %v347 = vunpack.c.l.b16 %v332
        %v348 = vpack.c.b16 %v345, %v344
        %v349 = vpack.c.b16 %v347, %v346
        %vm352 = vcmask 261120
        %v354 = vsel %vm352, %v328, 0
        %356 = vmatprep.subr.bf16.mxu0 0
        %357 = vmatpush1.bf16.msra.mxu0 %v348
        %358 = vmatprep.subr.bf16.mxu0 0
        %359 = vmatpush1.bf16.msra.mxu0 %v349
        %360 = vmatprep.subr.bf16.mxu0 0
        %361 = vmatpush1.bf16.msra.mxu0 0
        %362 = vmatprep.subr.bf16.mxu0 0
        %363 = vmatpush1.bf16.msra.mxu0 0
        %364 = vmatprep.subr.bf16.mxu0 0
        %365 = vmatpush1.bf16.msra.mxu0 0
        %366 = vmatprep.subr.bf16.mxu0 0
        %367 = vmatpush1.bf16.msra.mxu0 0
        %368 = vmatprep.subr.bf16.mxu0 0
        %369 = vmatpush1.bf16.msra.mxu0 0
        %370 = vmatprep.subr.bf16.mxu0 0
        %371 = vmatpush1.bf16.msra.mxu0 0
        %372 = vmatprep.subr.bf16.mxu0 0
        %373 = vmatpush1.bf16.msra.mxu0 0
        %374 = vmatprep.subr.bf16.mxu0 0
        %375 = vmatpush1.bf16.msra.mxu0 0
        %376 = vmatprep.subr.bf16.mxu0 0
        %377 = vmatpush1.bf16.msra.mxu0 0
        %378 = vmatprep.subr.bf16.mxu0 0
        %379 = vmatpush1.bf16.msra.mxu0 0
        %380 = vmatprep.subr.bf16.mxu0 0
        %381 = vmatpush1.bf16.msra.mxu0 0
        %382 = vmatprep.subr.bf16.mxu0 0
        %383 = vmatpush1.bf16.msra.mxu0 0
        %384 = vmatprep.subr.bf16.mxu0 0
        %385 = vmatpush1.bf16.msra.mxu0 0
        %386 = vmatprep.subr.bf16.mxu0 0
        %387 = vmatpush1.bf16.msra.mxu0 0
        %388 = vmatprep.mubr.bf16.mxu0 0
        %389 = vmatmul.mubr.bf16.gmra.mrb[0].mxu0 %v354
        %v390 = vpop.f32.mrb[0].mxu0
        %v391 = vadd.f32 %v338, %v390
        %v392 = vpop.f32.mrb[0].mxu0
        %v393 = vpop.f32.mrb[0].mxu0
        %v394 = vpop.f32.mrb[0].mxu0
        %395 = vdwg.mxu0
        %v396 = vld [vmem:[#allocation7] sm:$0xf]
        %v397 = vld [vmem:[#allocation7 + $0x4] sm:$0xf]
        %v398 = vld [vmem:[#allocation7 + $0x8] sm:$0xf]
        %v399 = vld [vmem:[#allocation7 + $0xc] sm:$0xf]
        %v400 = vld [vmem:[%s4] sm:$0x1]
        %v402 = vlaneseq
        %v403 = vshrl.u32 %v402, 7
        %v404 = vsub.s32 0, %v403
        %v405 = vrot.slane %v400, %v404
        %v411 = vunpack.c.l.b16 %v396
        %v412 = vunpack.c.l.b16 %v397
        %v413 = vunpack.c.l.b16 %v398
        %v414 = vunpack.c.l.b16 %v399
        %v415 = vpack.c.b16 %v412, %v411
        %v416 = vpack.c.b16 %v414, %v413
        %419 = vmatprep.subr.bf16.mxu0 0
        %420 = vmatpush1.bf16.msra.mxu0 %v415
        %421 = vmatprep.subr.bf16.mxu0 0
        %422 = vmatpush1.bf16.msra.mxu0 %v416
        %423 = vmatprep.subr.bf16.mxu0 0
        %424 = vmatpush1.bf16.msra.mxu0 0
        %425 = vmatprep.subr.bf16.mxu0 0
        %426 = vmatpush1.bf16.msra.mxu0 0
        %427 = vmatprep.subr.bf16.mxu0 0
        %428 = vmatpush1.bf16.msra.mxu0 0
        %429 = vmatprep.subr.bf16.mxu0 0
        %430 = vmatpush1.bf16.msra.mxu0 0
        %431 = vmatprep.subr.bf16.mxu0 0
        %432 = vmatpush1.bf16.msra.mxu0 0
        %433 = vmatprep.subr.bf16.mxu0 0
        %434 = vmatpush1.bf16.msra.mxu0 0
        %435 = vmatprep.subr.bf16.mxu0 0
        %436 = vmatpush1.bf16.msra.mxu0 0
        %437 = vmatprep.subr.bf16.mxu0 0
        %438 = vmatpush1.bf16.msra.mxu0 0
        %439 = vmatprep.subr.bf16.mxu0 0
        %440 = vmatpush1.bf16.msra.mxu0 0
        %441 = vmatprep.subr.bf16.mxu0 0
        %442 = vmatpush1.bf16.msra.mxu0 0
        %443 = vmatprep.subr.bf16.mxu0 0
        %444 = vmatpush1.bf16.msra.mxu0 0
        %445 = vmatprep.subr.bf16.mxu0 0
        %446 = vmatpush1.bf16.msra.mxu0 0
        %447 = vmatprep.subr.bf16.mxu0 0
        %448 = vmatpush1.bf16.msra.mxu0 0
        %449 = vmatprep.subr.bf16.mxu0 0
        %450 = vmatpush1.bf16.msra.mxu0 0
        %451 = vmatprep.mubr.bf16.mxu0 0
        %452 = vmatmul.mubr.bf16.gmra.mrb[0].mxu0 %v354
        %v453 = vpop.f32.mrb[0].mxu0
        %v454 = vadd.f32 %v405, %v453
        %v455 = vpop.f32.mrb[0].mxu0
        %v456 = vpop.f32.mrb[0].mxu0
        %v457 = vpop.f32.mrb[0].mxu0
        %458 = vdwg.mxu0
        %v459 = vpack.c.bf16 %v391, %v391
        %vm460 = vcmask 257024
        %461 = vst.msk [vmem:[%s318] sm:$0xf] %vm460, %v459
        %v462 = vpack.c.bf16 %v454, %v454
        %463 = vst.msk [vmem:[%s325] sm:$0xf] %vm460, %v462
        %s464 = sand.u32 %s162, 1
        %s465 = scalar_lea.sflag [#allocation4], %s464
        %s466 = sand.u32 %s162, 1
        %s467 = smul.addr %s466, 4
        %s468 = scalar_lea.vmem [#allocation8], %s467
        %s469 = sand.u32 %s190, 1
        %s470 = scalar_lea.sflag [#allocation10], %s469
        %s471 = sand.u32 %s190, 1
        %s472 = smul.addr %s471, 4
        %s473 = scalar_lea.vmem [#allocation9], %s472
        // Predicated region
        $region53: #{tpu_custom_call.1} parent=39 // pred_check
          %p474 = pneg %p172
        $region54: #{tpu_custom_call.1} parent=39 // pred_check_branch
          %476 = sbr.rel (%p474) target = $region56
        $region55: #{tpu_custom_call.1} parent=39 // pred_region
          %s478 = ssub.s32 64, 64
          %479 = vsyncadd %s465, %s478
          %s480 = sadd.s32 %s33, %s32
          %s481 = smul.addr %s480, 64
          %s482 = scalar_lea.hbm %s5, %s481
          %s484 = sshll.u32 %s468, 4
          %s485 = int_to_ptr.vmem [resolvable:$true] %s484
          %487 = dma.vmem_to_hbm [thread:$0]  %s485, 64, %s482, %s465
        $region56: #{tpu_custom_call.1} parent=39 // pred_fallthru
          _
        // Predicated region
        $region57: #{tpu_custom_call.1} parent=39 // pred_check
          %p488 = pneg %p200
        $region58: #{tpu_custom_call.1} parent=39 // pred_check_branch
          %490 = sbr.rel (%p488) target = $region60
        $region59: #{tpu_custom_call.1} parent=39 // pred_region
          %s492 = ssub.s32 64, 64
          %493 = vsyncadd %s470, %s492
          %s494 = sadd.s32 %s33, %s32
          %s495 = smul.addr %s494, 64
          %s496 = scalar_lea.hbm %s6, %s495
          %s498 = sshll.u32 %s473, 4
          %s499 = int_to_ptr.vmem [resolvable:$true] %s498
          %501 = dma.vmem_to_hbm [thread:$0]  %s499, 64, %s496, %s470
        $region60: #{tpu_custom_call.1} parent=39 // pred_fallthru
          _
      $region40: #{tpu_custom_call.1} parent=5 // pred_fallthru
        _
      %p502 = scmp.le.s32.totalorder 2, %s23
      // Predicated region
      $region61: #{tpu_custom_call.1} parent=5 // pred_check
        %p503 = pneg %p502
      $region62: #{tpu_custom_call.1} parent=5 // pred_check_branch
        %505 = sbr.rel (%p503) target = $region64
      $region63: #{tpu_custom_call.1} parent=5 // pred_region
        %s506 = ssub.s32 %s23, 2
        // Predicated region
        $region65: #{tpu_custom_call.1} parent=63 // pred_check
          %p507 = pneg %p178
        $region66: #{tpu_custom_call.1} parent=63 // pred_check_branch
          %509 = sbr.rel (%p507) target = $region68
        $region67: #{tpu_custom_call.1} parent=63 // pred_region
          %s510 = sand.u32 %s163, 1
          %s511 = scalar_lea.sflag [#allocation4], %s510
          %s512 = sand.u32 %s163, 1
          %s513 = smul.addr %s512, 4
          %s514 = scalar_lea.vmem [#allocation8], %s513
          %515 = dma.done %s511, 64
        $region68: #{tpu_custom_call.1} parent=63 // pred_fallthru
          _
        // Predicated region
        $region69: #{tpu_custom_call.1} parent=63 // pred_check
          %p516 = pneg %p206
        $region70: #{tpu_custom_call.1} parent=63 // pred_check_branch
          %518 = sbr.rel (%p516) target = $region72
        $region71: #{tpu_custom_call.1} parent=63 // pred_region
          %s519 = sand.u32 %s191, 1
          %s520 = scalar_lea.sflag [#allocation10], %s519
          %s521 = sand.u32 %s191, 1
          %s522 = smul.addr %s521, 4
          %s523 = scalar_lea.vmem [#allocation9], %s522
          %524 = dma.done %s520, 64
        $region72: #{tpu_custom_call.1} parent=63 // pred_fallthru
          _
      $region64: #{tpu_custom_call.1} parent=5 // pred_fallthru
        _
    $region6: #{tpu_custom_call.1} parent=1 // loop_footer
      %s27 = sadd.s32 1, %s23
    $region7: #{tpu_custom_call.1} parent=1 // loop_footer_branch
      %22 = sbr.rel target = $region3
    $region8: #{tpu_custom_call.1} parent=1 // loop_exit
      _
    %525 = vsyncpa [#allocation3], 1
    %s526 = scalar_lea.sflag [#allocation3], 1
    %527 = vsyncpa %s526, 1
    %528 = vsyncpa [#allocation6], 1
    %529 = vsyncpa [#allocation4], 1
    %s530 = scalar_lea.sflag [#allocation4], 1
    %531 = vsyncpa %s530, 1
    %532 = vsyncpa [#allocation10], 1
    %s533 = scalar_lea.sflag [#allocation10], 1
    %534 = vsyncpa %s533, 1

// kernel: tpu_custom_call.1
$region0: #{tpu_custom_call.1}
  #allocation0 [shape = 'u32[]', space=smem, size = 0x4, offset = 0x4, fixed_abs, tag = 'smem constant byte address 0x4 - core index']
  #allocation1 [shape = 'u32[144,128]{1,0:T(1,128)}', space=vmem, size = 0x12000, scoped, tag = 'internal scratch']
  %s0 = inlined_call_operand.hbm [shape: f32[2,8,32], index: 0, kind: input, shape index: {}]
  %s1 = inlined_call_operand.hbm [shape: bf16[32,32], index: 1, kind: input, shape index: {}]
  %s2 = inlined_call_operand.vmem [shape: f32[1,32], index: 2, kind: input, shape index: {}]
  %s3 = inlined_call_operand.hbm [shape: bf16[32,32], index: 3, kind: input, shape index: {}]
  %s4 = inlined_call_operand.vmem [shape: f32[1,32], index: 4, kind: input, shape index: {}]
  %s5 = inlined_call_operand.hbm [shape: bf16[2,8,32], index: 5, kind: output, shape index: {0}]
  %s6 = inlined_call_operand.hbm [shape: bf16[2,8,32], index: 6, kind: output, shape index: {1}]
  %7 = xla_tuple %s5, %s6
  %s8 = sld [smem:[#allocation0]]
  $region73: #{tpu_custom_call.1} parent=0
    _
  %s10 = ssub.s32 1, %s8
  %s11 = scalar_select 0, %s10, %s8
  $region1: #{tpu_custom_call.1} parent=0
    #allocation2 [shape = 'u8[8192]{0}', space=vmem, size = 0x2000, scoped, tag = 'input window, operand 0']
    #allocation3 [shape = 's32[2]{0}', space=sflag, size = 0x8, scoped, tag = 'scoped memory for tpu_custom_call.1']
    #allocation4 [shape = 's32[2]{0}', space=sflag, size = 0x8, scoped, tag = 'scoped memory for tpu_custom_call.1']
    #allocation5 [shape = 'u8[8192]{0}', space=vmem, size = 0x2000, scoped, tag = 'input window, operand 1, single buffered']
    #allocation6 [shape = 's32[1]{0}', space=sflag, size = 0x4, scoped, tag = 'scoped memory for tpu_custom_call.1']
    #allocation7 [shape = 'u8[8192]{0}', space=vmem, size = 0x2000, scoped, tag = 'input window, operand 3, single buffered']
    #allocation8 [shape = 'u8[4096]{0}', space=vmem, size = 0x1000, scoped, tag = 'output window, operand 0']
    #allocation9 [shape = 'u8[4096]{0}', space=vmem, size = 0x1000, scoped, tag = 'output window, operand 1']
    #allocation10 [shape = 's32[2]{0}', space=sflag, size = 0x8, scoped, tag = 'scoped memory for tpu_custom_call.1']
    %12 = vsyncpa [#allocation3], 0
    %s13 = scalar_lea.sflag [#allocation3], 1
    %14 = vsyncpa %s13, 0
    %15 = vsyncpa [#allocation6], 0
    %16 = vsyncpa [#allocation4], 0
    %s17 = scalar_lea.sflag [#allocation4], 1
    %18 = vsyncpa %s17, 0
    %19 = vsyncpa [#allocation10], 0
    %s20 = scalar_lea.sflag [#allocation10], 1
    %21 = vsyncpa %s20, 0
    loop: start=0, step=1, limit=4
    $region2: #{tpu_custom_call.1} parent=1 // loop_pre_header
      _
    $region3: #{tpu_custom_call.1} parent=1 // loop_header
      %s23 = sphi 0, %s27
      %p24 = scmp.ge.s32.totalorder %s23, 4
      %s30 = sphi 0, %s42
      %s31 = sphi 0, %s38
      %s32 = sphi 0, %s30
      %s33 = sphi 0, %s31
      %s34 = sphi 0, %s32
      %s35 = sphi 0, %s33
      %s47 = sphi 0, %s49
      %s50 = sphi 0, %s47
      %s51 = sphi 0, %s50
      %s67 = sphi 0, %s51
      %s71 = sphi 0, %s71
      %s73 = sphi 0, %s71
      %s74 = sphi 0, %s73
      %s88 = sphi 0, %s74
      %s92 = sphi 0, %s92
      %s94 = sphi 0, %s92
      %s95 = sphi 0, %s94
      %s109 = sphi 0, %s95
      %s113 = sphi 0, %s113
      %s115 = sphi 0, %s113
      %s116 = sphi 0, %s115
      %s130 = sphi 0, %s116
      %s134 = sphi 0, %s134
      %s136 = sphi 0, %s134
      %s137 = sphi 0, %s136
      %s151 = sphi 0, %s137
      %s159 = sphi 0, %s161
      %s162 = sphi 0, %s159
      %s163 = sphi 0, %s162
      %s179 = sphi 0, %s163
      %s187 = sphi 0, %s189
      %s190 = sphi 0, %s187
      %s191 = sphi 0, %s190
      %s207 = sphi 0, %s191
    $region4: #{tpu_custom_call.1} parent=1 // loop_header_branch
      %26 = sbr.rel (%p24) target = $region8
    $region5: #{tpu_custom_call.1} parent=1 // loop_body
      %s28 = ssub.s32 %s23, 1
      %s29 = ssub.s32 %s23, 2
      %s36 = sadd.s32 1, %s31
      %p37 = scmp.ge.s32.totalorder %s36, 1
      %s38 = scalar_select %p37, 0, %s36
      %s39 = sadd.s32 1, %s30
      %s40 = scalar_select %p37, %s39, %s30
      %p41 = scmp.ge.s32.totalorder %s40, 2
      %s42 = scalar_select %p41, 0, %s40
      %s43 = ssub.s32 %s30, %s42
      %s44 = ssub.s32 %s31, %s38
      %s45 = sor.u32 %s43, %s44
      %p46 = scmp.eq.s32.totalorder %s45, 0
      %s48 = sadd.s32 %s47, 1
      %s49 = scalar_select %p46, %s47, %s48
      %p52 = pneg %p46
      %p53 = scmp.eq.s32.totalorder %s23, 1
      %p54 = por %p52, %p53
      %p55 = scmp.ne.s32.totalorder %s47, %s50
      %p56 = scmp.eq.s32.totalorder %s23, 0
      %p57 = por %p55, %p56
      %p58 = scmp.ne.s32.totalorder %s47, %s50
      %p59 = scmp.eq.s32.totalorder %s28, 1
      %p60 = por %p58, %p59
      %p61 = scmp.ne.s32.totalorder %s50, %s51
      %p62 = scmp.eq.s32.totalorder %s28, 0
      %p63 = por %p61, %p62
      %p64 = scmp.ne.s32.totalorder %s50, %s51
      %p65 = scmp.eq.s32.totalorder %s29, 1
      %p66 = por %p64, %p65
      %p68 = scmp.ne.s32.totalorder %s51, %s67
      %p69 = scmp.eq.s32.totalorder %s29, 0
      %p70 = por %p68, %p69
      %s72 = sadd.s32 %s71, 1
      %p75 = scmp.eq.s32.totalorder %s23, 1
      %p76 = scmp.ne.s32.totalorder %s71, %s73
      %p77 = scmp.eq.s32.totalorder %s23, 0
      %p78 = por %p76, %p77
      %p79 = scmp.ne.s32.totalorder %s71, %s73
      %p80 = scmp.eq.s32.totalorder %s28, 1
      %p81 = por %p79, %p80
      %p82 = scmp.ne.s32.totalorder %s73, %s74
      %p83 = scmp.eq.s32.totalorder %s28, 0
      %p84 = por %p82, %p83
      %p85 = scmp.ne.s32.totalorder %s73, %s74
      %p86 = scmp.eq.s32.totalorder %s29, 1
      %p87 = por %p85, %p86
      %p89 = scmp.ne.s32.totalorder %s74, %s88
      %p90 = scmp.eq.s32.totalorder %s29, 0
      %p91 = por %p89, %p90
      %s93 = sadd.s32 %s92, 1
      %p96 = scmp.eq.s32.totalorder %s23, 1
      %p97 = scmp.ne.s32.totalorder %s92, %s94
      %p98 = scmp.eq.s32.totalorder %s23, 0
      %p99 = por %p97, %p98
      %p100 = scmp.ne.s32.totalorder %s92, %s94
      %p101 = scmp.eq.s32.totalorder %s28, 1
      %p102 = por %p100, %p101
      %p103 = scmp.ne.s32.totalorder %s94, %s95
      %p104 = scmp.eq.s32.totalorder %s28, 0
      %p105 = por %p103, %p104
      %p106 = scmp.ne.s32.totalorder %s94, %s95
      %p107 = scmp.eq.s32.totalorder %s29, 1
      %p108 = por %p106, %p107
      %p110 = scmp.ne.s32.totalorder %s95, %s109
      %p111 = scmp.eq.s32.totalorder %s29, 0
      %p112 = por %p110, %p111
      %s114 = sadd.s32 %s113, 1
      %p117 = scmp.eq.s32.totalorder %s23, 1
      %p118 = scmp.ne.s32.totalorder %s113, %s115
      %p119 = scmp.eq.s32.totalorder %s23, 0
      %p120 = por %p118, %p119
      %p121 = scmp.ne.s32.totalorder %s113, %s115
      %p122 = scmp.eq.s32.totalorder %s28, 1
      %p123 = por %p121, %p122
      %p124 = scmp.ne.s32.totalorder %s115, %s116
      %p125 = scmp.eq.s32.totalorder %s28, 0
      %p126 = por %p124, %p125
      %p127 = scmp.ne.s32.totalorder %s115, %s116
      %p128 = scmp.eq.s32.totalorder %s29, 1
      %p129 = por %p127, %p128
      %p131 = scmp.ne.s32.totalorder %s116, %s130
      %p132 = scmp.eq.s32.totalorder %s29, 0
      %p133 = por %p131, %p132
      %s135 = sadd.s32 %s134, 1
      %p138 = scmp.eq.s32.totalorder %s23, 1
      %p139 = scmp.ne.s32.totalorder %s134, %s136
      %p140 = scmp.eq.s32.totalorder %s23, 0
      %p141 = por %p139, %p140
      %p142 = scmp.ne.s32.totalorder %s134, %s136
      %p143 = scmp.eq.s32.totalorder %s28, 1
      %p144 = por %p142, %p143
      %p145 = scmp.ne.s32.totalorder %s136, %s137
      %p146 = scmp.eq.s32.totalorder %s28, 0
      %p147 = por %p145, %p146
      %p148 = scmp.ne.s32.totalorder %s136, %s137
      %p149 = scmp.eq.s32.totalorder %s29, 1
      %p150 = por %p148, %p149
      %p152 = scmp.ne.s32.totalorder %s137, %s151
      %p153 = scmp.eq.s32.totalorder %s29, 0
      %p154 = por %p152, %p153
      %s155 = ssub.s32 %s30, %s42
      %s156 = ssub.s32 %s31, %s38
      %s157 = sor.u32 %s155, %s156
      %p158 = scmp.eq.s32.totalorder %s157, 0
      %s160 = sadd.s32 %s159, 1
      %s161 = scalar_select %p158, %s159, %s160
      %p164 = pneg %p158
      %p165 = scmp.eq.s32.totalorder %s23, 1
      %p166 = por %p164, %p165
      %p167 = scmp.ne.s32.totalorder %s159, %s162
      %p168 = scmp.eq.s32.totalorder %s23, 0
      %p169 = por %p167, %p168
      %p170 = scmp.ne.s32.totalorder %s159, %s162
      %p171 = scmp.eq.s32.totalorder %s28, 1
      %p172 = por %p170, %p171
      %p173 = scmp.ne.s32.totalorder %s162, %s163
      %p174 = scmp.eq.s32.totalorder %s28, 0
      %p175 = por %p173, %p174
      %p176 = scmp.ne.s32.totalorder %s162, %s163
      %p177 = scmp.eq.s32.totalorder %s29, 1
      %p178 = por %p176, %p177
      %p180 = scmp.ne.s32.totalorder %s163, %s179
      %p181 = scmp.eq.s32.totalorder %s29, 0
      %p182 = por %p180, %p181
      %s183 = ssub.s32 %s30, %s42
      %s184 = ssub.s32 %s31, %s38
      %s185 = sor.u32 %s183, %s184
      %p186 = scmp.eq.s32.totalorder %s185, 0
      %s188 = sadd.s32 %s187, 1
      %s189 = scalar_select %p186, %s187, %s188
      %p192 = pneg %p186
      %p193 = scmp.eq.s32.totalorder %s23, 1
      %p194 = por %p192, %p193
      %p195 = scmp.ne.s32.totalorder %s187, %s190
      %p196 = scmp.eq.s32.totalorder %s23, 0
      %p197 = por %p195, %p196
      %p198 = scmp.ne.s32.totalorder %s187, %s190
      %p199 = scmp.eq.s32.totalorder %s28, 1
      %p200 = por %p198, %p199
      %p201 = scmp.ne.s32.totalorder %s190, %s191
      %p202 = scmp.eq.s32.totalorder %s28, 0
      %p203 = por %p201, %p202
      %p204 = scmp.ne.s32.totalorder %s190, %s191
      %p205 = scmp.eq.s32.totalorder %s29, 1
      %p206 = por %p204, %p205
      %p208 = scmp.ne.s32.totalorder %s191, %s207
      %p209 = scmp.eq.s32.totalorder %s29, 0
      %p210 = por %p208, %p209
      %p211 = scmp.le.s32.totalorder 1, %s23
      %p212 = scmp.lt.s32.totalorder %s23, 3
      %p213 = pnand %p211, %p212
      %p214 = pneg %p213
      // Predicated region
      $region9: #{tpu_custom_call.1} parent=5 // pred_check
        _
      $region10: #{tpu_custom_call.1} parent=5 // pred_check_branch
        %216 = sbr.rel (%p213) target = $region12
      $region11: #{tpu_custom_call.1} parent=5 // pred_region
        %s217 = ssub.s32 %s23, 1
        // Predicated region
        $region13: #{tpu_custom_call.1} parent=11 // pred_check
          %p218 = pneg %p84
        $region14: #{tpu_custom_call.1} parent=11 // pred_check_branch
          %220 = sbr.rel (%p218) target = $region16
        $region15: #{tpu_custom_call.1} parent=11 // pred_region
          %s222 = ssub.s32 256, 256
          %223 = vsyncadd [#allocation6], %s222
          %s224 = sshll.u32 [#allocation5], 4
          %s225 = int_to_ptr.vmem [resolvable:$true] %s224
          %230 = dma.hbm_to_vmem [thread:$0]  %s1, 256, %s225, [#allocation6], 64, 64, 4
        $region16: #{tpu_custom_call.1} parent=11 // pred_fallthru
          _
        // Predicated region
        $region17: #{tpu_custom_call.1} parent=11 // pred_check
          %p231 = pneg %p105
        $region18: #{tpu_custom_call.1} parent=11 // pred_check_branch
          %233 = sbr.rel (%p231) target = $region20
        $region19: #{tpu_custom_call.1} parent=11 // pred_region
          _
        $region20: #{tpu_custom_call.1} parent=11 // pred_fallthru
          _
        // Predicated region
        $region21: #{tpu_custom_call.1} parent=11 // pred_check
          %p234 = pneg %p126
        $region22: #{tpu_custom_call.1} parent=11 // pred_check_branch
          %236 = sbr.rel (%p234) target = $region24
        $region23: #{tpu_custom_call.1} parent=11 // pred_region
          %s238 = ssub.s32 256, 256
          %239 = vsyncadd [#allocation6], %s238
          %s240 = sshll.u32 [#allocation7], 4
          %s241 = int_to_ptr.vmem [resolvable:$true] %s240
          %246 = dma.hbm_to_vmem [thread:$0]  %s3, 256, %s241, [#allocation6], 64, 64, 4
        $region24: #{tpu_custom_call.1} parent=11 // pred_fallthru
          _
        // Predicated region
        $region25: #{tpu_custom_call.1} parent=11 // pred_check
          %p247 = pneg %p147
        $region26: #{tpu_custom_call.1} parent=11 // pred_check_branch
          %249 = sbr.rel (%p247) target = $region28
        $region27: #{tpu_custom_call.1} parent=11 // pred_region
          _
        $region28: #{tpu_custom_call.1} parent=11 // pred_fallthru
          _
      $region12: #{tpu_custom_call.1} parent=5 // pred_fallthru
        _
      %p250 = scmp.lt.s32.totalorder %s23, 2
      // Predicated region
      $region29: #{tpu_custom_call.1} parent=5 // pred_check
        %p251 = pneg %p250
      $region30: #{tpu_custom_call.1} parent=5 // pred_check_branch
        %253 = sbr.rel (%p251) target = $region32
      $region31: #{tpu_custom_call.1} parent=5 // pred_region
        // Predicated region
        $region33: #{tpu_custom_call.1} parent=31 // pred_check
          %p254 = pneg %p57
        $region34: #{tpu_custom_call.1} parent=31 // pred_check_branch
          %256 = sbr.rel (%p254) target = $region36
        $region35: #{tpu_custom_call.1} parent=31 // pred_region
          %s257 = sand.u32 %s47, 1
          %s258 = scalar_lea.sflag [#allocation3], %s257
          %s259 = sand.u32 %s47, 1
          %s260 = smul.addr %s259, 8
          %s261 = scalar_lea.vmem [#allocation2], %s260
          %s263 = ssub.s32 128, 128
          %264 = vsyncadd %s258, %s263
          %s265 = sadd.s32 %s31, %s30
          %s266 = smul.addr %s265, 128
          %s267 = scalar_lea.hbm %s0, %s266
          %s269 = sshll.u32 %s261, 4
          %s270 = int_to_ptr.vmem [resolvable:$true] %s269
          %272 = dma.hbm_to_vmem [thread:$0]  %s267, 128, %s270, %s258
        $region36: #{tpu_custom_call.1} parent=31 // pred_fallthru
          _
      $region32: #{tpu_custom_call.1} parent=5 // pred_fallthru
        _
      %p273 = scmp.le.s32.totalorder 1, %s23
      %p274 = scmp.lt.s32.totalorder %s23, 3
      %p275 = pnand %p273, %p274
      %p276 = pneg %p275
      // Predicated region
      $region37: #{tpu_custom_call.1} parent=5 // pred_check
        _
      $region38: #{tpu_custom_call.1} parent=5 // pred_check_branch
        %278 = sbr.rel (%p275) target = $region40
      $region39: #{tpu_custom_call.1} parent=5 // pred_region
        %s279 = ssub.s32 %s23, 1
        %s280 = sand.u32 %s50, 1
        %s281 = scalar_lea.sflag [#allocation3], %s280
        %s282 = sand.u32 %s50, 1
        %s283 = smul.addr %s282, 8
        %s284 = scalar_lea.vmem [#allocation2], %s283
        // Predicated region
        $region41: #{tpu_custom_call.1} parent=39 // pred_check
          %p285 = pneg %p63
        $region42: #{tpu_custom_call.1} parent=39 // pred_check_branch
          %287 = sbr.rel (%p285) target = $region44
        $region43: #{tpu_custom_call.1} parent=39 // pred_region
          %288 = dma.done %s281, 128
        $region44: #{tpu_custom_call.1} parent=39 // pred_fallthru
          _
        // Predicated region
        $region45: #{tpu_custom_call.1} parent=39 // pred_check
          %p289 = pneg %p84
        $region46: #{tpu_custom_call.1} parent=39 // pred_check_branch
          %291 = sbr.rel (%p289) target = $region48
        $region47: #{tpu_custom_call.1} parent=39 // pred_region
          %292 = dma.done [#allocation6], 256
        $region48: #{tpu_custom_call.1} parent=39 // pred_fallthru
          _
        // Predicated region
        $region49: #{tpu_custom_call.1} parent=39 // pred_check
          %p293 = pneg %p126
        $region50: #{tpu_custom_call.1} parent=39 // pred_check_branch
          %295 = sbr.rel (%p293) target = $region52
        $region51: #{tpu_custom_call.1} parent=39 // pred_region
          %296 = dma.done [#allocation6], 256
        $region52: #{tpu_custom_call.1} parent=39 // pred_fallthru
          _
        %s297 = sand.u32 %s50, 1
        %s298 = scalar_lea.sflag [#allocation3], %s297
        %s299 = sand.u32 %s50, 1
        %s300 = smul.addr %s299, 8
        %s301 = scalar_lea.vmem [#allocation2], %s300
        %p302 = pneg %p63
        %p303 = pneg %p60
        %p304 = pneg %p84
        %p305 = pneg %p81
        %p306 = pneg %p105
        %p307 = pneg %p102
        %p308 = pneg %p126
        %p309 = pneg %p123
        %p310 = pneg %p147
        %p311 = pneg %p144
        %p312 = pneg %p175
        %p313 = pneg %p172
        %s314 = sand.u32 %s162, 1
        %s315 = scalar_lea.sflag [#allocation4], %s314
        %s316 = sand.u32 %s162, 1
        %s317 = smul.addr %s316, 4
        %s318 = scalar_lea.vmem [#allocation8], %s317
        %p319 = pneg %p203
        %p320 = pneg %p200
        %s321 = sand.u32 %s190, 1
        %s322 = scalar_lea.sflag [#allocation10], %s321
        %s323 = sand.u32 %s190, 1
        %s324 = smul.addr %s323, 4
        %s325 = scalar_lea.vmem [#allocation9], %s324
        %v327 = vld [vmem:[%s284] sm:$0xff]
        %v328 = vpack.c.bf16 %v327, %v327
        %v329 = vld [vmem:[#allocation5] sm:$0xf]
        %v330 = vld [vmem:[#allocation5 + $0x4] sm:$0xf]
        %v331 = vld [vmem:[#allocation5 + $0x8] sm:$0xf]
        %v332 = vld [vmem:[#allocation5 + $0xc] sm:$0xf]
        %v333 = vld [vmem:[%s2] sm:$0x1]
        %v335 = vlaneseq
        %v336 = vshrl.u32 %v335, 7
        %v337 = vsub.s32 0, %v336
        %v338 = vrot.slane %v333, %v337
        %v344 = vunpack.c.l.b16 %v329
        %v345 = vunpack.c.l.b16 %v330
        %v346 = vunpack.c.l.b16 %v331
        %v347 = vunpack.c.l.b16 %v332
        %v348 = vpack.c.b16 %v345, %v344
        %v349 = vpack.c.b16 %v347, %v346
        %vm352 = vcmask 261120
        %v354 = vsel %vm352, %v328, 0
        %356 = vmatprep.subr.bf16.mxu0 0
        %357 = vmatpush1.bf16.msra.mxu0 %v348
        %358 = vmatprep.subr.bf16.mxu0 0
        %359 = vmatpush1.bf16.msra.mxu0 %v349
        %360 = vmatprep.subr.bf16.mxu0 0
        %361 = vmatpush1.bf16.msra.mxu0 0
        %362 = vmatprep.subr.bf16.mxu0 0
        %363 = vmatpush1.bf16.msra.mxu0 0
        %364 = vmatprep.subr.bf16.mxu0 0
        %365 = vmatpush1.bf16.msra.mxu0 0
        %366 = vmatprep.subr.bf16.mxu0 0
        %367 = vmatpush1.bf16.msra.mxu0 0
        %368 = vmatprep.subr.bf16.mxu0 0
        %369 = vmatpush1.bf16.msra.mxu0 0
        %370 = vmatprep.subr.bf16.mxu0 0
        %371 = vmatpush1.bf16.msra.mxu0 0
        %372 = vmatprep.subr.bf16.mxu0 0
        %373 = vmatpush1.bf16.msra.mxu0 0
        %374 = vmatprep.subr.bf16.mxu0 0
        %375 = vmatpush1.bf16.msra.mxu0 0
        %376 = vmatprep.subr.bf16.mxu0 0
        %377 = vmatpush1.bf16.msra.mxu0 0
        %378 = vmatprep.subr.bf16.mxu0 0
        %379 = vmatpush1.bf16.msra.mxu0 0
        %380 = vmatprep.subr.bf16.mxu0 0
        %381 = vmatpush1.bf16.msra.mxu0 0
        %382 = vmatprep.subr.bf16.mxu0 0
        %383 = vmatpush1.bf16.msra.mxu0 0
        %384 = vmatprep.subr.bf16.mxu0 0
        %385 = vmatpush1.bf16.msra.mxu0 0
        %386 = vmatprep.subr.bf16.mxu0 0
        %387 = vmatpush1.bf16.msra.mxu0 0
        %388 = vmatprep.mubr.bf16.mxu0 0
        %389 = vmatmul.mubr.bf16.gmra.mrb[0].mxu0 %v354
        %v390 = vpop.f32.mrb[0].mxu0
        %v391 = vadd.f32 %v338, %v390
        %v392 = vpop.f32.mrb[0].mxu0
        %v393 = vpop.f32.mrb[0].mxu0
        %v394 = vpop.f32.mrb[0].mxu0
        %395 = vdwg.mxu0
        %v396 = vld [vmem:[#allocation7] sm:$0xf]
        %v397 = vld [vmem:[#allocation7 + $0x4] sm:$0xf]
        %v398 = vld [vmem:[#allocation7 + $0x8] sm:$0xf]
        %v399 = vld [vmem:[#allocation7 + $0xc] sm:$0xf]
        %v400 = vld [vmem:[%s4] sm:$0x1]
        %v402 = vlaneseq
        %v403 = vshrl.u32 %v402, 7
        %v404 = vsub.s32 0, %v403
        %v405 = vrot.slane %v400, %v404
        %v411 = vunpack.c.l.b16 %v396
        %v412 = vunpack.c.l.b16 %v397
        %v413 = vunpack.c.l.b16 %v398
        %v414 = vunpack.c.l.b16 %v399
        %v415 = vpack.c.b16 %v412, %v411
        %v416 = vpack.c.b16 %v414, %v413
        %419 = vmatprep.subr.bf16.mxu0 0
        %420 = vmatpush1.bf16.msra.mxu0 %v415
        %421 = vmatprep.subr.bf16.mxu0 0
        %422 = vmatpush1.bf16.msra.mxu0 %v416
        %423 = vmatprep.subr.bf16.mxu0 0
        %424 = vmatpush1.bf16.msra.mxu0 0
        %425 = vmatprep.subr.bf16.mxu0 0
        %426 = vmatpush1.bf16.msra.mxu0 0
        %427 = vmatprep.subr.bf16.mxu0 0
        %428 = vmatpush1.bf16.msra.mxu0 0
        %429 = vmatprep.subr.bf16.mxu0 0
        %430 = vmatpush1.bf16.msra.mxu0 0
        %431 = vmatprep.subr.bf16.mxu0 0
        %432 = vmatpush1.bf16.msra.mxu0 0
        %433 = vmatprep.subr.bf16.mxu0 0
        %434 = vmatpush1.bf16.msra.mxu0 0
        %435 = vmatprep.subr.bf16.mxu0 0
        %436 = vmatpush1.bf16.msra.mxu0 0
        %437 = vmatprep.subr.bf16.mxu0 0
        %438 = vmatpush1.bf16.msra.mxu0 0
        %439 = vmatprep.subr.bf16.mxu0 0
        %440 = vmatpush1.bf16.msra.mxu0 0
        %441 = vmatprep.subr.bf16.mxu0 0
        %442 = vmatpush1.bf16.msra.mxu0 0
        %443 = vmatprep.subr.bf16.mxu0 0
        %444 = vmatpush1.bf16.msra.mxu0 0
        %445 = vmatprep.subr.bf16.mxu0 0
        %446 = vmatpush1.bf16.msra.mxu0 0
        %447 = vmatprep.subr.bf16.mxu0 0
        %448 = vmatpush1.bf16.msra.mxu0 0
        %449 = vmatprep.subr.bf16.mxu0 0
        %450 = vmatpush1.bf16.msra.mxu0 0
        %451 = vmatprep.mubr.bf16.mxu0 0
        %452 = vmatmul.mubr.bf16.gmra.mrb[0].mxu0 %v354
        %v453 = vpop.f32.mrb[0].mxu0
        %v454 = vadd.f32 %v405, %v453
        %v455 = vpop.f32.mrb[0].mxu0
        %v456 = vpop.f32.mrb[0].mxu0
        %v457 = vpop.f32.mrb[0].mxu0
        %458 = vdwg.mxu0
        %v459 = vpack.c.bf16 %v391, %v391
        %vm460 = vcmask 257024
        %461 = vst.msk [vmem:[%s318] sm:$0xf] %vm460, %v459
        %v462 = vpack.c.bf16 %v454, %v454
        %463 = vst.msk [vmem:[%s325] sm:$0xf] %vm460, %v462
        %s464 = sand.u32 %s162, 1
        %s465 = scalar_lea.sflag [#allocation4], %s464
        %s466 = sand.u32 %s162, 1
        %s467 = smul.addr %s466, 4
        %s468 = scalar_lea.vmem [#allocation8], %s467
        %s469 = sand.u32 %s190, 1
        %s470 = scalar_lea.sflag [#allocation10], %s469
        %s471 = sand.u32 %s190, 1
        %s472 = smul.addr %s471, 4
        %s473 = scalar_lea.vmem [#allocation9], %s472
        // Predicated region
        $region53: #{tpu_custom_call.1} parent=39 // pred_check
          %p474 = pneg %p172
        $region54: #{tpu_custom_call.1} parent=39 // pred_check_branch
          %476 = sbr.rel (%p474) target = $region56
        $region55: #{tpu_custom_call.1} parent=39 // pred_region
          %s478 = ssub.s32 64, 64
          %479 = vsyncadd %s465, %s478
          %s480 = sadd.s32 %s33, %s32
          %s481 = smul.addr %s480, 64
          %s482 = scalar_lea.hbm %s5, %s481
          %s484 = sshll.u32 %s468, 4
          %s485 = int_to_ptr.vmem [resolvable:$true] %s484
          %487 = dma.vmem_to_hbm [thread:$0]  %s485, 64, %s482, %s465
        $region56: #{tpu_custom_call.1} parent=39 // pred_fallthru
          _
        // Predicated region
        $region57: #{tpu_custom_call.1} parent=39 // pred_check
          %p488 = pneg %p200
        $region58: #{tpu_custom_call.1} parent=39 // pred_check_branch
          %490 = sbr.rel (%p488) target = $region60
        $region59: #{tpu_custom_call.1} parent=39 // pred_region
          %s492 = ssub.s32 64, 64
          %493 = vsyncadd %s470, %s492
          %s494 = sadd.s32 %s33, %s32
          %s495 = smul.addr %s494, 64
          %s496 = scalar_lea.hbm %s6, %s495
          %s498 = sshll.u32 %s473, 4
          %s499 = int_to_ptr.vmem [resolvable:$true] %s498
          %501 = dma.vmem_to_hbm [thread:$0]  %s499, 64, %s496, %s470
        $region60: #{tpu_custom_call.1} parent=39 // pred_fallthru
          _
      $region40: #{tpu_custom_call.1} parent=5 // pred_fallthru
        _
      %p502 = scmp.le.s32.totalorder 2, %s23
      // Predicated region
      $region61: #{tpu_custom_call.1} parent=5 // pred_check
        %p503 = pneg %p502
      $region62: #{tpu_custom_call.1} parent=5 // pred_check_branch
        %505 = sbr.rel (%p503) target = $region64
      $region63: #{tpu_custom_call.1} parent=5 // pred_region
        %s506 = ssub.s32 %s23, 2
        // Predicated region
        $region65: #{tpu_custom_call.1} parent=63 // pred_check
          %p507 = pneg %p178
        $region66: #{tpu_custom_call.1} parent=63 // pred_check_branch
          %509 = sbr.rel (%p507) target = $region68
        $region67: #{tpu_custom_call.1} parent=63 // pred_region
          %s510 = sand.u32 %s163, 1
          %s511 = scalar_lea.sflag [#allocation4], %s510
          %s512 = sand.u32 %s163, 1
          %s513 = smul.addr %s512, 4
          %s514 = scalar_lea.vmem [#allocation8], %s513
          %515 = dma.done %s511, 64
        $region68: #{tpu_custom_call.1} parent=63 // pred_fallthru
          _
        // Predicated region
        $region69: #{tpu_custom_call.1} parent=63 // pred_check
          %p516 = pneg %p206
        $region70: #{tpu_custom_call.1} parent=63 // pred_check_branch
          %518 = sbr.rel (%p516) target = $region72
        $region71: #{tpu_custom_call.1} parent=63 // pred_region
          %s519 = sand.u32 %s191, 1
          %s520 = scalar_lea.sflag [#allocation10], %s519
          %s521 = sand.u32 %s191, 1
          %s522 = smul.addr %s521, 4
          %s523 = scalar_lea.vmem [#allocation9], %s522
          %524 = dma.done %s520, 64
        $region72: #{tpu_custom_call.1} parent=63 // pred_fallthru
          _
      $region64: #{tpu_custom_call.1} parent=5 // pred_fallthru
        _
    $region6: #{tpu_custom_call.1} parent=1 // loop_footer
      %s27 = sadd.s32 1, %s23
    $region7: #{tpu_custom_call.1} parent=1 // loop_footer_branch
      %22 = sbr.rel target = $region3
    $region8: #{tpu_custom_call.1} parent=1 // loop_exit
      _
    %525 = vsyncpa [#allocation3], 1
    %s526 = scalar_lea.sflag [#allocation3], 1
    %527 = vsyncpa %s526, 1
    %528 = vsyncpa [#allocation6], 1
    %529 = vsyncpa [#allocation4], 1
    %s530 = scalar_lea.sflag [#allocation4], 1
    %531 = vsyncpa %s530, 1
    %532 = vsyncpa [#allocation10], 1
    %s533 = scalar_lea.sflag [#allocation10], 1
    %534 = vsyncpa %s533, 1

</llo_original>
